<compile_context>
chip_gen: v6e
topology: v6e:2x2x1
jax: 0.10.0
libtpu: 0.0.40
codegen_flags: <defaults>
</compile_context>

<pallas_src>
import math
from functools import partial

import jax
import jax.numpy as jnp
from jax import lax
from jax.experimental import pallas as pl
from jax.experimental.pallas import tpu as pltpu

NEG_INF = -1e30


# ----------------------------- small helpers --------------------------------

def _layernorm(x, w, b, eps=1e-5):
    mu = jnp.mean(x, axis=-1, keepdims=True)
    var = jnp.mean(jnp.square(x - mu), axis=-1, keepdims=True)
    return (x - mu) * lax.rsqrt(var + eps) * w + b


def _vmem_limit_bytes():
    """Explicit scoped-VMEM limit: ~75% of physical (64 MiB v7x / 128 MiB v5e,v6e)."""
    try:
        cap = int(pltpu.get_tpu_info().vmem_capacity_bytes)
    except Exception:
        cap = 64 * 1024 * 1024
    return min(3 * cap // 4, 100 * 1024 * 1024)


def _pick_batch_tile(batch, seq):
    """Pack enough batch elements per grid step that matmuls see >=128 rows."""
    bt = min(batch, max(1, -(-128 // seq)))      # ceil(128/seq), capped at B
    while batch % bt:
        bt -= 1
    return bt


# ------------------- fused L-layer transformer encoder stack -----------------

def encoder_stack_kernel(x_ref, pad_ref,
                         wqkv_ref, bqkv_ref, wo_ref, bo_ref,
                         ln1w_ref, ln1b_ref,
                         w1_ref, b1_ref, w2_ref, b2_ref,
                         ln2w_ref, ln2b_ref,
                         out_ref, ctx_scr, *, n_heads):
    f32 = jnp.float32
    Bt, S, E = out_ref.shape
    H = n_heads
    dh = E // H
    R = Bt * S
    scale = 1.0 / math.sqrt(dh)
    cd = wqkv_ref.dtype                      # MXU compute dtype (bf16 / f32)

    # Layer 0: seed the resident residual stream from the embedded input.
    @pl.when(pl.program_id(1) == 0)
    def _():
        out_ref[...] = x_ref[...]

    x2 = out_ref[...].reshape(R, E)          # (R, E) f32 residual carry

    # ---- fused QKV projection: ONE full-width MXU matmul ----
    qkv = jnp.dot(x2.astype(cd), wqkv_ref[0],
                  preferred_element_type=f32) + bqkv_ref[0]        # (R, 3E)

    # split into (Bt*H, S, dh) head tiles: static slices + leading-dim stack
    def split_heads(col0):
        tiles = [qkv[b * S:(b + 1) * S, col0 + h * dh:col0 + (h + 1) * dh]
                 for b in range(Bt) for h in range(H)]
        return jnp.stack(tiles, axis=0)

    q = split_heads(0)
    k = split_heads(E)
    v = split_heads(2 * E)

    # additive attention bias: causal (built in-kernel, no (B,S,S) DMA)
    # plus the (Bt,1,S) key-padding bias.
    row = lax.broadcasted_iota(jnp.int32, (S, S), 0)
    col = lax.broadcasted_iota(jnp.int32, (S, S), 1)
    causal = jnp.where(col > row, NEG_INF, 0.0).astype(f32)        # (S, S)
    pad = pad_ref[...]                                             # (Bt, 1, S)

    s = jnp.einsum('bqd,bkd->bqk', (q * scale).astype(cd), k.astype(cd),
                   preferred_element_type=f32)                     # (BtH, S, S)
    s = (s.reshape(Bt, H, S, S) + causal[None, None]
         + pad[:, None, :, :]).reshape(Bt * H, S, S)
    s = s - jnp.max(s, axis=-1, keepdims=True)
    p = jnp.exp(s)
    # approx reciprocal runs on the EUP slot; rows sum to 1 within ~1e-3.
    p = p * pl.reciprocal(jnp.sum(p, axis=-1, keepdims=True), approx=True)

    ctx = jnp.einsum('bqk,bkd->bqd', p.astype(cd), v.astype(cd),
                     preferred_element_type=f32)                   # (BtH, S, dh)

    # ---- head merge via VMEM scratch (no (H,S,E) intermediate), then one
    #      full-depth (E,E) output projection ----
    for b in range(Bt):
        for h in range(H):
            ctx_scr[b * S:(b + 1) * S, h * dh:(h + 1) * dh] = (
                ctx[b * H + h].astype(cd))
    attn = jnp.dot(ctx_scr[...], wo_ref[0],
                   preferred_element_type=f32) + bo_ref[0]         # (R, E)

    src = _layernorm(x2 + attn, ln1w_ref[0], ln1b_ref[0])

    # ---- feed-forward (relu), full-width matmuls ----
    # TODO(synk): tile over an F grid axis / flash-style KV loop for
    # production S, F on v7x's 64 MiB VMEM.
    hid = jnp.maximum(jnp.dot(src.astype(cd), w1_ref[0],
                              preferred_element_type=f32) + b1_ref[0], 0.0)
    ff = jnp.dot(hid.astype(cd), w2_ref[0],
                 preferred_element_type=f32) + b2_ref[0]
    y = _layernorm(src + ff, ln2w_ref[0], ln2b_ref[0])

    out_ref[...] = y.reshape(Bt, S, E).astype(out_ref.dtype)


def encoder_stack(x, pad_bias, stack, *, n_heads, batch_tile):
    """x: (B,S,E) f32, pad_bias: (B,1,S) f32 additive key-padding bias.

    One pallas_call runs all L encoder layers: grid = (B//bt, L) with the
    batch axis parallel (megacore) and the layer axis arbitrary (residual
    carried in the resident output block).
    """
    B, S, E = x.shape
    L = stack['wqkv'].shape[0]
    F = stack['w1'].shape[-1]
    bt = batch_tile
    nb = B // bt
    cd = stack['wqkv'].dtype
    H = n_heads

    weights = (stack['wqkv'], stack['bqkv'], stack['wo'], stack['bo'],
               stack['ln1w'], stack['ln1b'],
               stack['w1'], stack['b1'], stack['w2'], stack['b2'],
               stack['ln2w'], stack['ln2b'])

    def wspec(arr):
        # Layer-indexed weight blocks: next layer's weights auto-prefetch.
        return pl.BlockSpec((1,) + arr.shape[1:], lambda b, l: (l, 0, 0))

    in_specs = [pl.BlockSpec((bt, S, E), lambda b, l: (b, 0, 0)),   # x
                pl.BlockSpec((bt, 1, S), lambda b, l: (b, 0, 0))]   # pad bias
    in_specs += [wspec(w) for w in weights]

    wbytes = jnp.dtype(cd).itemsize
    flops_bl = (2 * S * E * 3 * E      # fused QKV
                + 4 * S * S * E        # QK^T + PV
                + 2 * S * E * E        # Wo
                + 4 * S * E * F)       # FFN
    cost = pl.CostEstimate(
        flops=int(B * L * flops_bl),
        transcendentals=int(B * L * H * S * S),
        bytes_accessed=int(2 * B * S * E * 4
                           + nb * L * (3 * E * E + E * E + 2 * E * F) * wbytes))

    return pl.pallas_call(
        partial(encoder_stack_kernel, n_heads=n_heads),
        out_shape=jax.ShapeDtypeStruct((B, S, E), jnp.float32),
        grid_spec=pltpu.PrefetchScalarGridSpec(
            num_scalar_prefetch=0,
            grid=(nb, L),
            in_specs=in_specs,
            out_specs=pl.BlockSpec((bt, S, E), lambda b, l: (b, 0, 0)),
            scratch_shapes=[pltpu.VMEM((bt * S, E), cd)]),
        compiler_params=pltpu.CompilerParams(
            dimension_semantics=("parallel", "arbitrary"),
            vmem_limit_bytes=_vmem_limit_bytes()),
        cost_estimate=cost,
    )(x, pad_bias, *weights)


# ----------------------------- parameter packing -----------------------------

def pack_params(params, *, n_heads, compute_dtype=jnp.bfloat16):
    """One-time conversion of PyTorch-layout params to the kernel layout.

    Per-layer Wq/Wk/Wv are fused into a single (E, 3E) matrix (head-major
    output columns, identical to nn.MultiheadAttention's in_proj layout),
    all linear weights are transposed to (in, out), and every per-layer tensor
    is stacked along a leading L axis (the layer grid axis).  MXU operands are
    cast to `compute_dtype` (bf16 recommended on v5e/v6e/v7x; accumulation is
    always f32 inside the kernel).
    """
    f32 = jnp.float32
    cd = compute_dtype
    del n_heads  # head split is done with static slices inside the kernel

    cols = {k: [] for k in ('wqkv', 'bqkv', 'wo', 'bo', 'ln1w', 'ln1b',
                            'w1', 'b1', 'w2', 'b2', 'ln2w', 'ln2b')}
    for l in params['layers']:
        wq, wk, wv = (jnp.asarray(l[n], f32).T for n in ('wq', 'wk', 'wv'))
        cols['wqkv'].append(jnp.concatenate([wq, wk, wv], axis=1))      # (E,3E)
        cols['bqkv'].append(jnp.concatenate(
            [jnp.asarray(l['bq'], f32), jnp.asarray(l['bk'], f32),
             jnp.asarray(l['bv'], f32)])[None, :])                      # (1,3E)
        cols['wo'].append(jnp.asarray(l['wo'], f32).T)                  # (E,E)
        cols['bo'].append(jnp.asarray(l['bo'], f32)[None, :])
        cols['ln1w'].append(jnp.asarray(l['ln1w'], f32)[None, :])
        cols['ln1b'].append(jnp.asarray(l['ln1b'], f32)[None, :])
        cols['w1'].append(jnp.asarray(l['w1'], f32).T)                  # (E,F)
        cols['b1'].append(jnp.asarray(l['b1'], f32)[None, :])
        cols['w2'].append(jnp.asarray(l['w2'], f32).T)                  # (F,E)
        cols['b2'].append(jnp.asarray(l['b2'], f32)[None, :])
        cols['ln2w'].append(jnp.asarray(l['ln2w'], f32)[None, :])
        cols['ln2b'].append(jnp.asarray(l['ln2b'], f32)[None, :])

    stack = {k: jnp.stack(v) for k, v in cols.items()}
    for k in ('wqkv', 'wo', 'w1', 'w2'):
        stack[k] = stack[k].astype(cd)

    return dict(
        stack=stack,
        embedding=jnp.asarray(params['embedding'], f32),
        te_div_term=jnp.asarray(params['te_div_term'], f32),
        intensity_wT=jnp.asarray(params['intensity_w'], f32).T,   # (E, K)
        intensity_b=jnp.asarray(params['intensity_b'], f32),
        time_wT=jnp.asarray(params['time_w'], f32).T,             # (E, 1)
        event_wT=jnp.asarray(params['event_w'], f32).T,           # (E, K)
    )


# ------------------------------ full forward ---------------------------------

def hawkes_transformer_forward(params, time, events, *, n_heads):
    """params = pack_params(...) output. Returns (h, cond_lam, time_pred, event_logit)."""
    f32 = jnp.float32
    B, S = events.shape
    E = params['embedding'].shape[1]

    non_padded = (events != 0)               # PADDING_CONST == 0
    npm_f = non_padded.astype(f32)

    # temporal encoding + event embedding (elementwise glue, stays in XLA)
    te = time.astype(f32)[:, :, None] * params['te_div_term'][None, None, :]
    idx = jnp.arange(E)
    te = jnp.where((idx % 2) == 0, jnp.sin(te), jnp.cos(te))
    te = te * npm_f[:, :, None]
    x = params['embedding'][events] + te                     # (B, S, E) f32

    # additive key-padding bias (B, 1, S); the causal part is built in-kernel
    pad_bias = jnp.where(non_padded, 0.0, NEG_INF).astype(f32)[:, None, :]

    bt = _pick_batch_tile(B, S)
    h = encoder_stack(x, pad_bias, params['stack'], n_heads=n_heads,
                      batch_tile=bt)

    # ---- tiny prediction heads in plain XLA ----
    # IntensityNetwork: linear -> softplus(threshold=10) -> type-masked sum
    it = h @ params['intensity_wT'] + params['intensity_b']          # (B,S,K)
    sp = jnp.where(it > 10.0, it,
                   jnp.log1p(jnp.exp(jnp.minimum(it, 10.0))))
    K = params['intensity_b'].shape[0]
    type_mask = (events[:, :, None] == jnp.arange(1, K + 1)[None, None, :])
    cond_lam = jnp.sum(sp * type_mask.astype(f32), axis=-1)          # (B,S)

    time_pred = (h @ params['time_wT'])[..., 0] * npm_f              # (B,S)
    event_logit = (h @ params['event_wT']) * npm_f[..., None]        # (B,S,K)

    return h, cond_lam, time_pred, event_logit


# ----------------------------- parameter init --------------------------------

def init_params(key, n_event_types, d_model, n_heads, dim_ff, n_layers):
    keys = jax.random.split(key, 8 + n_layers)

    def nrm(k, shape, scale=0.05):
        return scale * jax.random.normal(k, shape, dtype=jnp.float32)

    emb = nrm(keys[0], (n_event_types + 1, d_model))
    emb = emb.at[0].set(0.0)                 # padding_idx = 0

    layers = []
    for li in range(n_layers):
        lk = jax.random.split(keys[1 + li], 12)
        layers.append(dict(
            wq=nrm(lk[0], (d_model, d_model)), bq=nrm(lk[1], (d_model,)),
            wk=nrm(lk[2], (d_model, d_model)), bk=nrm(lk[3], (d_model,)),
            wv=nrm(lk[4], (d_model, d_model)), bv=nrm(lk[5], (d_model,)),
            wo=nrm(lk[6], (d_model, d_model)), bo=nrm(lk[7], (d_model,)),
            w1=nrm(lk[8], (dim_ff, d_model)), b1=nrm(lk[9], (dim_ff,)),
            w2=nrm(lk[10], (d_model, dim_ff)), b2=nrm(lk[11], (d_model,)),
            ln1w=jnp.ones((d_model,), jnp.float32),
            ln1b=jnp.zeros((d_model,), jnp.float32),
            ln2w=jnp.ones((d_model,), jnp.float32),
            ln2b=jnp.zeros((d_model,), jnp.float32),
        ))

    te_div_term = jnp.exp(2.0 * (jnp.arange(d_model) // 2)
                          * (-jnp.log(10000.0)) / d_model).astype(jnp.float32)

    return dict(
        embedding=emb,
        te_div_term=te_div_term,
        layers=layers,
        intensity_w=nrm(keys[1 + n_layers], (n_event_types, d_model)),
        intensity_b=nrm(keys[2 + n_layers], (n_event_types,)),
        time_w=nrm(keys[3 + n_layers], (1, d_model)),
        event_w=nrm(keys[4 + n_layers], (n_event_types, d_model)),
    )


# ----------------------------------- main ------------------------------------

if __name__ == "__main__":
    B, S = 2, 8
    K = 3                        # n_event_types
    E, H, F, L = 32, 4, 64, 2    # d_model, n_heads, dim_feedforward, n_layers

    key = jax.random.PRNGKey(0)
    kp, kt, ke = jax.random.split(key, 3)

    raw_params = init_params(kp, K, E, H, F, L)
    # One-time layout conversion (fused QKV, transposes, L-stacking, bf16 cast).
    params = pack_params(raw_params, n_heads=H, compute_dtype=jnp.bfloat16)

    dt = jax.random.uniform(kt, (B, S), minval=0.05, maxval=1.0)
    time = jnp.cumsum(dt, axis=1)
    events = jax.random.randint(ke, (B, S), 1, K + 1)
    events = events.at[1, -1].set(0)        # exercise the padding mask
    time = time * (events != 0)

    fwd = jax.jit(partial(hawkes_transformer_forward, n_heads=H))
    h, cond_lam, time_pred, event_logit = fwd(params, time, events)
    jax.block_until_ready((h, cond_lam, time_pred, event_logit))

    assert h.shape == (B, S, E)
    assert cond_lam.shape == (B, S)
    assert time_pred.shape == (B, S)
    assert event_logit.shape == (B, S, K)
    assert bool(jnp.all(jnp.isfinite(h)))
    assert bool(jnp.all(jnp.isfinite(cond_lam)))
    assert bool(jnp.all(jnp.isfinite(time_pred)))
    assert bool(jnp.all(jnp.isfinite(event_logit)))
    print("KERNEL_OK")
</pallas_src>

<mosaic_0001>
module attributes {stable_mosaic.version = 11 : i64} {
  func.func @encoder_stack_kernel(%arg0: i32, %arg1: i32, %arg2: memref<2x8x32xf32, #tpu.memory_space<vmem>>, %arg3: memref<2x1x8xf32, #tpu.memory_space<vmem>>, %arg4: memref<1x32x96xbf16, #tpu.memory_space<vmem>>, %arg5: memref<1x1x96xf32, #tpu.memory_space<vmem>>, %arg6: memref<1x32x32xbf16, #tpu.memory_space<vmem>>, %arg7: memref<1x1x32xf32, #tpu.memory_space<vmem>>, %arg8: memref<1x1x32xf32, #tpu.memory_space<vmem>>, %arg9: memref<1x1x32xf32, #tpu.memory_space<vmem>>, %arg10: memref<1x32x64xbf16, #tpu.memory_space<vmem>>, %arg11: memref<1x1x64xf32, #tpu.memory_space<vmem>>, %arg12: memref<1x64x32xbf16, #tpu.memory_space<vmem>>, %arg13: memref<1x1x32xf32, #tpu.memory_space<vmem>>, %arg14: memref<1x1x32xf32, #tpu.memory_space<vmem>>, %arg15: memref<1x1x32xf32, #tpu.memory_space<vmem>>, %arg16: memref<2x8x32xf32, #tpu.memory_space<vmem>>, %arg17: memref<16x32xbf16, #tpu.memory_space<vmem>>) attributes {dimension_semantics = [#tpu.dimension_semantics<parallel>, #tpu.dimension_semantics<arbitrary>], iteration_bounds = array<i64: 1, 2>, scalar_prefetch = 0 : i64, scratch_operands = 1 : i64, tpu.core_type = #tpu.core_type<tc>, window_params = [{transform_indices = @transform_0, window_bounds = array<i64: 2, 8, 32>}, {transform_indices = @transform_1, window_bounds = array<i64: 2, 1, 8>}, {transform_indices = @transform_2, window_bounds = array<i64: 1, 32, 96>}, {transform_indices = @transform_3, window_bounds = array<i64: 1, 1, 96>}, {transform_indices = @transform_4, window_bounds = array<i64: 1, 32, 32>}, {transform_indices = @transform_5, window_bounds = array<i64: 1, 1, 32>}, {transform_indices = @transform_6, window_bounds = array<i64: 1, 1, 32>}, {transform_indices = @transform_7, window_bounds = array<i64: 1, 1, 32>}, {transform_indices = @transform_8, window_bounds = array<i64: 1, 32, 64>}, {transform_indices = @transform_9, window_bounds = array<i64: 1, 1, 64>}, {transform_indices = @transform_10, window_bounds = array<i64: 1, 64, 32>}, {transform_indices = @transform_11, window_bounds = array<i64: 1, 1, 32>}, {transform_indices = @transform_12, window_bounds = array<i64: 1, 1, 32>}, {transform_indices = @transform_13, window_bounds = array<i64: 1, 1, 32>}, {transform_indices = @transform_14, window_bounds = array<i64: 2, 8, 32>}]} {
    %c0_i32 = arith.constant 0 : i32
    %0 = arith.cmpi eq, %arg1, %c0_i32 : i32
    %1 = arith.extui %0 : i1 to i32
    %c0_i32_0 = arith.constant 0 : i32
    %2 = arith.cmpi ne, %1, %c0_i32_0 : i32
    scf.if %2 {
      %c0_81 = arith.constant 0 : index
      %c0_82 = arith.constant 0 : index
      %c0_83 = arith.constant 0 : index
      %211 = vector.load %arg2[%c0_81, %c0_82, %c0_83] : memref<2x8x32xf32, #tpu.memory_space<vmem>>, vector<2x8x32xf32>
      %c0_84 = arith.constant 0 : index
      %c0_85 = arith.constant 0 : index
      %c0_86 = arith.constant 0 : index
      %212 = vector.load %arg16[%c0_84, %c0_85, %c0_86] : memref<2x8x32xf32, #tpu.memory_space<vmem>>, vector<2x8x32xf32>
      tpu.vector_store %arg16[%c0_84, %c0_85, %c0_86], %211 {strides = array<i32>} : memref<2x8x32xf32, #tpu.memory_space<vmem>>, vector<2x8x32xf32>,
    } else {
    }
    %c0 = arith.constant 0 : index
    %c0_1 = arith.constant 0 : index
    %c0_2 = arith.constant 0 : index
    %3 = vector.load %arg16[%c0, %c0_1, %c0_2] : memref<2x8x32xf32, #tpu.memory_space<vmem>>, vector<2x8x32xf32>
    %4 = vector.shape_cast %3 : vector<2x8x32xf32> to vector<16x32xf32>
    %5 = arith.truncf %4 : vector<16x32xf32> to vector<16x32xbf16>
    %c0_3 = arith.constant 0 : index
    %c0_4 = arith.constant 0 : index
    %c0_5 = arith.constant 0 : index
    %6 = vector.load %arg4[%c0_3, %c0_4, %c0_5] : memref<1x32x96xbf16, #tpu.memory_space<vmem>>, vector<1x32x96xbf16>
    %7 = vector.shape_cast %6 : vector<1x32x96xbf16> to vector<32x96xbf16>
    %cst = arith.constant dense<0.000000e+00> : vector<16x96xf32>
    %8 = tpu.matmul %5, %7, %cst {dimension_numbers = #tpu.dot_dimension_numbers<[1], [0], [0], [1], [0, 0, 1, 1], [], []>} : vector<16x32xbf16>, vector<32x96xbf16>, vector<16x96xf32> -> vector<16x96xf32>
    %c0_6 = arith.constant 0 : index
    %c0_7 = arith.constant 0 : index
    %c0_8 = arith.constant 0 : index
    %9 = vector.load %arg5[%c0_6, %c0_7, %c0_8] : memref<1x1x96xf32, #tpu.memory_space<vmem>>, vector<1x1x96xf32>
    %10 = vector.shape_cast %9 : vector<1x1x96xf32> to vector<1x96xf32>
    %11 = vector.broadcast %10 : vector<1x96xf32> to vector<16x96xf32>
    %12 = arith.addf %8, %11 : vector<16x96xf32>
    %13 = vector.extract_strided_slice %12 {offsets = [0, 0], sizes = [8, 8], strides = [1, 1]} : vector<16x96xf32> to vector<8x8xf32>
    %14 = vector.extract_strided_slice %12 {offsets = [0, 8], sizes = [8, 8], strides = [1, 1]} : vector<16x96xf32> to vector<8x8xf32>
    %15 = vector.extract_strided_slice %12 {offsets = [0, 16], sizes = [8, 8], strides = [1, 1]} : vector<16x96xf32> to vector<8x8xf32>
    %16 = vector.extract_strided_slice %12 {offsets = [0, 24], sizes = [8, 8], strides = [1, 1]} : vector<16x96xf32> to vector<8x8xf32>
    %17 = vector.extract_strided_slice %12 {offsets = [8, 0], sizes = [8, 8], strides = [1, 1]} : vector<16x96xf32> to vector<8x8xf32>
    %18 = vector.extract_strided_slice %12 {offsets = [8, 8], sizes = [8, 8], strides = [1, 1]} : vector<16x96xf32> to vector<8x8xf32>
    %19 = vector.extract_strided_slice %12 {offsets = [8, 16], sizes = [8, 8], strides = [1, 1]} : vector<16x96xf32> to vector<8x8xf32>
    %20 = vector.extract_strided_slice %12 {offsets = [8, 24], sizes = [8, 8], strides = [1, 1]} : vector<16x96xf32> to vector<8x8xf32>
    %21 = vector.shape_cast %13 : vector<8x8xf32> to vector<1x8x8xf32>
    %22 = vector.shape_cast %14 : vector<8x8xf32> to vector<1x8x8xf32>
    %23 = vector.shape_cast %15 : vector<8x8xf32> to vector<1x8x8xf32>
    %24 = vector.shape_cast %16 : vector<8x8xf32> to vector<1x8x8xf32>
    %25 = vector.shape_cast %17 : vector<8x8xf32> to vector<1x8x8xf32>
    %26 = vector.shape_cast %18 : vector<8x8xf32> to vector<1x8x8xf32>
    %27 = vector.shape_cast %19 : vector<8x8xf32> to vector<1x8x8xf32>
    %28 = vector.shape_cast %20 : vector<8x8xf32> to vector<1x8x8xf32>
    %29 = tpu.concatenate %21, %22, %23, %24, %25, %26, %27, %28 in 0 : vector<1x8x8xf32>, vector<1x8x8xf32>, vector<1x8x8xf32>, vector<1x8x8xf32>, vector<1x8x8xf32>, vector<1x8x8xf32>, vector<1x8x8xf32>, vector<1x8x8xf32> -> vector<8x8x8xf32>
    %30 = vector.extract_strided_slice %12 {offsets = [0, 32], sizes = [8, 8], strides = [1, 1]} : vector<16x96xf32> to vector<8x8xf32>
    %31 = vector.extract_strided_slice %12 {offsets = [0, 40], sizes = [8, 8], strides = [1, 1]} : vector<16x96xf32> to vector<8x8xf32>
    %32 = vector.extract_strided_slice %12 {offsets = [0, 48], sizes = [8, 8], strides = [1, 1]} : vector<16x96xf32> to vector<8x8xf32>
    %33 = vector.extract_strided_slice %12 {offsets = [0, 56], sizes = [8, 8], strides = [1, 1]} : vector<16x96xf32> to vector<8x8xf32>
    %34 = vector.extract_strided_slice %12 {offsets = [8, 32], sizes = [8, 8], strides = [1, 1]} : vector<16x96xf32> to vector<8x8xf32>
    %35 = vector.extract_strided_slice %12 {offsets = [8, 40], sizes = [8, 8], strides = [1, 1]} : vector<16x96xf32> to vector<8x8xf32>
    %36 = vector.extract_strided_slice %12 {offsets = [8, 48], sizes = [8, 8], strides = [1, 1]} : vector<16x96xf32> to vector<8x8xf32>
    %37 = vector.extract_strided_slice %12 {offsets = [8, 56], sizes = [8, 8], strides = [1, 1]} : vector<16x96xf32> to vector<8x8xf32>
    %38 = vector.shape_cast %30 : vector<8x8xf32> to vector<1x8x8xf32>
    %39 = vector.shape_cast %31 : vector<8x8xf32> to vector<1x8x8xf32>
    %40 = vector.shape_cast %32 : vector<8x8xf32> to vector<1x8x8xf32>
    %41 = vector.shape_cast %33 : vector<8x8xf32> to vector<1x8x8xf32>
    %42 = vector.shape_cast %34 : vector<8x8xf32> to vector<1x8x8xf32>
    %43 = vector.shape_cast %35 : vector<8x8xf32> to vector<1x8x8xf32>
    %44 = vector.shape_cast %36 : vector<8x8xf32> to vector<1x8x8xf32>
    %45 = vector.shape_cast %37 : vector<8x8xf32> to vector<1x8x8xf32>
    %46 = tpu.concatenate %38, %39, %40, %41, %42, %43, %44, %45 in 0 : vector<1x8x8xf32>, vector<1x8x8xf32>, vector<1x8x8xf32>, vector<1x8x8xf32>, vector<1x8x8xf32>, vector<1x8x8xf32>, vector<1x8x8xf32>, vector<1x8x8xf32> -> vector<8x8x8xf32>
    %47 = vector.extract_strided_slice %12 {offsets = [0, 64], sizes = [8, 8], strides = [1, 1]} : vector<16x96xf32> to vector<8x8xf32>
    %48 = vector.extract_strided_slice %12 {offsets = [0, 72], sizes = [8, 8], strides = [1, 1]} : vector<16x96xf32> to vector<8x8xf32>
    %49 = vector.extract_strided_slice %12 {offsets = [0, 80], sizes = [8, 8], strides = [1, 1]} : vector<16x96xf32> to vector<8x8xf32>
    %50 = vector.extract_strided_slice %12 {offsets = [0, 88], sizes = [8, 8], strides = [1, 1]} : vector<16x96xf32> to vector<8x8xf32>
    %51 = vector.extract_strided_slice %12 {offsets = [8, 64], sizes = [8, 8], strides = [1, 1]} : vector<16x96xf32> to vector<8x8xf32>
    %52 = vector.extract_strided_slice %12 {offsets = [8, 72], sizes = [8, 8], strides = [1, 1]} : vector<16x96xf32> to vector<8x8xf32>
    %53 = vector.extract_strided_slice %12 {offsets = [8, 80], sizes = [8, 8], strides = [1, 1]} : vector<16x96xf32> to vector<8x8xf32>
    %54 = vector.extract_strided_slice %12 {offsets = [8, 88], sizes = [8, 8], strides = [1, 1]} : vector<16x96xf32> to vector<8x8xf32>
    %55 = vector.shape_cast %47 : vector<8x8xf32> to vector<1x8x8xf32>
    %56 = vector.shape_cast %48 : vector<8x8xf32> to vector<1x8x8xf32>
    %57 = vector.shape_cast %49 : vector<8x8xf32> to vector<1x8x8xf32>
    %58 = vector.shape_cast %50 : vector<8x8xf32> to vector<1x8x8xf32>
    %59 = vector.shape_cast %51 : vector<8x8xf32> to vector<1x8x8xf32>
    %60 = vector.shape_cast %52 : vector<8x8xf32> to vector<1x8x8xf32>
    %61 = vector.shape_cast %53 : vector<8x8xf32> to vector<1x8x8xf32>
    %62 = vector.shape_cast %54 : vector<8x8xf32> to vector<1x8x8xf32>
    %63 = tpu.concatenate %55, %56, %57, %58, %59, %60, %61, %62 in 0 : vector<1x8x8xf32>, vector<1x8x8xf32>, vector<1x8x8xf32>, vector<1x8x8xf32>, vector<1x8x8xf32>, vector<1x8x8xf32>, vector<1x8x8xf32>, vector<1x8x8xf32> -> vector<8x8x8xf32>
    %64 = tpu.iota {dimensions = array<i32: 0>} : vector<8x8xi32>
    %65 = tpu.iota {dimensions = array<i32: 1>} : vector<8x8xi32>
    %66 = arith.cmpi sgt, %65, %64 : vector<8x8xi32>
    %cst_9 = arith.constant -1.000000e+30 : f32
    %cst_10 = arith.constant 0.000000e+00 : f32
    %67 = vector.broadcast %cst_9 : f32 to vector<8x8xf32>
    %68 = vector.broadcast %cst_10 : f32 to vector<8x8xf32>
    %69 = arith.select %66, %67, %68 : vector<8x8xi1>, vector<8x8xf32>
    %c0_11 = arith.constant 0 : index
    %c0_12 = arith.constant 0 : index
    %c0_13 = arith.constant 0 : index
    %70 = vector.load %arg3[%c0_11, %c0_12, %c0_13] : memref<2x1x8xf32, #tpu.memory_space<vmem>>, vector<2x1x8xf32>
    %cst_14 = arith.constant 0.353553385 : f32
    %71 = vector.broadcast %cst_14 : f32 to vector<8x8x8xf32>
    %72 = arith.mulf %29, %71 : vector<8x8x8xf32>
    %73 = arith.truncf %72 : vector<8x8x8xf32> to vector<8x8x8xbf16>
    %74 = arith.truncf %46 : vector<8x8x8xf32> to vector<8x8x8xbf16>
    "tpu.trace_start"() <{level = 10 : i32, message = "bqd,bkd->bqk"}> : () -> ()
    %cst_15 = arith.constant dense<0.000000e+00> : vector<8x8x8xf32>
    %75 = tpu.matmul %73, %74, %cst_15 {dimension_numbers = #tpu.dot_dimension_numbers<[2], [2], [1], [1], [0, 0, 0, 1, 1, 1], [0], [0]>} : vector<8x8x8xbf16>, vector<8x8x8xbf16>, vector<8x8x8xf32> -> vector<8x8x8xf32>
    "tpu.trace_stop"() : () -> ()
    %76 = vector.shape_cast %75 : vector<8x8x8xf32> to vector<2x4x8x8xf32>
    %77 = vector.shape_cast %69 : vector<8x8xf32> to vector<1x1x8x8xf32>
    %78 = vector.broadcast %77 : vector<1x1x8x8xf32> to vector<2x4x8x8xf32>
    %79 = arith.addf %76, %78 : vector<2x4x8x8xf32>
    %80 = vector.shape_cast %70 : vector<2x1x8xf32> to vector<2x1x1x8xf32>
    %81 = vector.broadcast %80 : vector<2x1x1x8xf32> to vector<2x4x8x8xf32>
    %82 = arith.addf %79, %81 : vector<2x4x8x8xf32>
    %83 = vector.shape_cast %82 : vector<2x4x8x8xf32> to vector<8x8x8xf32>
    %cst_16 = arith.constant dense<0xFF800000> : vector<8x8xf32>
    %84 = vector.multi_reduction <maximumf>, %83, %cst_16 [2] : vector<8x8x8xf32> to vector<8x8xf32>
    %85 = vector.shape_cast %84 : vector<8x8xf32> to vector<8x8x1xf32>
    %86 = vector.broadcast %85 : vector<8x8x1xf32> to vector<8x8x8xf32>
    %87 = arith.subf %83, %86 : vector<8x8x8xf32>
    %88 = math.exp %87 : vector<8x8x8xf32>
    %cst_17 = arith.constant dense<0.000000e+00> : vector<8x8xf32>
    %89 = vector.multi_reduction <add>, %88, %cst_17 [2] : vector<8x8x8xf32> to vector<8x8xf32>
    %90 = vector.shape_cast %89 : vector<8x8xf32> to vector<8x8x1xf32>
    %91 = tpu.reciprocal %90 {approx = true} : vector<8x8x1xf32> -> vector<8x8x1xf32>
    %92 = vector.broadcast %91 : vector<8x8x1xf32> to vector<8x8x8xf32>
    %93 = arith.mulf %88, %92 : vector<8x8x8xf32>
    %94 = arith.truncf %93 : vector<8x8x8xf32> to vector<8x8x8xbf16>
    %95 = arith.truncf %63 : vector<8x8x8xf32> to vector<8x8x8xbf16>
    "tpu.trace_start"() <{level = 10 : i32, message = "bqk,bkd->bqd"}> : () -> ()
    %cst_18 = arith.constant dense<0.000000e+00> : vector<8x8x8xf32>
    %96 = tpu.matmul %94, %95, %cst_18 {dimension_numbers = #tpu.dot_dimension_numbers<[2], [1], [1], [2], [0, 0, 0, 1, 1, 2], [0], [0]>} : vector<8x8x8xbf16>, vector<8x8x8xbf16>, vector<8x8x8xf32> -> vector<8x8x8xf32>
    "tpu.trace_stop"() : () -> ()
    %97 = vector.extract_strided_slice %96 {offsets = [0, 0, 0], sizes = [1, 8, 8], strides = [1, 1, 1]} : vector<8x8x8xf32> to vector<1x8x8xf32>
    %98 = vector.shape_cast %97 : vector<1x8x8xf32> to vector<8x8xf32>
    %99 = arith.truncf %98 : vector<8x8xf32> to vector<8x8xbf16>
    %c0_19 = arith.constant 0 : index
    %c0_20 = arith.constant 0 : index
    %100 = vector.load %arg17[%c0_19, %c0_20] : memref<16x32xbf16, #tpu.memory_space<vmem>>, vector<8x8xbf16>
    tpu.vector_store %arg17[%c0_19, %c0_20], %99 {strides = array<i32>} : memref<16x32xbf16, #tpu.memory_space<vmem>>, vector<8x8xbf16>,
    %101 = vector.extract_strided_slice %96 {offsets = [1, 0, 0], sizes = [1, 8, 8], strides = [1, 1, 1]} : vector<8x8x8xf32> to vector<1x8x8xf32>
    %102 = vector.shape_cast %101 : vector<1x8x8xf32> to vector<8x8xf32>
    %103 = arith.truncf %102 : vector<8x8xf32> to vector<8x8xbf16>
    %c0_21 = arith.constant 0 : index
    %c8 = arith.constant 8 : index
    %104 = vector.load %arg17[%c0_21, %c8] : memref<16x32xbf16, #tpu.memory_space<vmem>>, vector<8x8xbf16>
    tpu.vector_store %arg17[%c0_21, %c8], %103 {strides = array<i32>} : memref<16x32xbf16, #tpu.memory_space<vmem>>, vector<8x8xbf16>,
    %105 = vector.extract_strided_slice %96 {offsets = [2, 0, 0], sizes = [1, 8, 8], strides = [1, 1, 1]} : vector<8x8x8xf32> to vector<1x8x8xf32>
    %106 = vector.shape_cast %105 : vector<1x8x8xf32> to vector<8x8xf32>
    %107 = arith.truncf %106 : vector<8x8xf32> to vector<8x8xbf16>
    %c0_22 = arith.constant 0 : index
    %c16 = arith.constant 16 : index
    %108 = vector.load %arg17[%c0_22, %c16] : memref<16x32xbf16, #tpu.memory_space<vmem>>, vector<8x8xbf16>
    tpu.vector_store %arg17[%c0_22, %c16], %107 {strides = array<i32>} : memref<16x32xbf16, #tpu.memory_space<vmem>>, vector<8x8xbf16>,
    %109 = vector.extract_strided_slice %96 {offsets = [3, 0, 0], sizes = [1, 8, 8], strides = [1, 1, 1]} : vector<8x8x8xf32> to vector<1x8x8xf32>
    %110 = vector.shape_cast %109 : vector<1x8x8xf32> to vector<8x8xf32>
    %111 = arith.truncf %110 : vector<8x8xf32> to vector<8x8xbf16>
    %c0_23 = arith.constant 0 : index
    %c24 = arith.constant 24 : index
    %112 = vector.load %arg17[%c0_23, %c24] : memref<16x32xbf16, #tpu.memory_space<vmem>>, vector<8x8xbf16>
    tpu.vector_store %arg17[%c0_23, %c24], %111 {strides = array<i32>} : memref<16x32xbf16, #tpu.memory_space<vmem>>, vector<8x8xbf16>,
    %113 = vector.extract_strided_slice %96 {offsets = [4, 0, 0], sizes = [1, 8, 8], strides = [1, 1, 1]} : vector<8x8x8xf32> to vector<1x8x8xf32>
    %114 = vector.shape_cast %113 : vector<1x8x8xf32> to vector<8x8xf32>
    %115 = arith.truncf %114 : vector<8x8xf32> to vector<8x8xbf16>
    %c8_24 = arith.constant 8 : index
    %c0_25 = arith.constant 0 : index
    %116 = vector.load %arg17[%c8_24, %c0_25] : memref<16x32xbf16, #tpu.memory_space<vmem>>, vector<8x8xbf16>
    tpu.vector_store %arg17[%c8_24, %c0_25], %115 {strides = array<i32>} : memref<16x32xbf16, #tpu.memory_space<vmem>>, vector<8x8xbf16>,
    %117 = vector.extract_strided_slice %96 {offsets = [5, 0, 0], sizes = [1, 8, 8], strides = [1, 1, 1]} : vector<8x8x8xf32> to vector<1x8x8xf32>
    %118 = vector.shape_cast %117 : vector<1x8x8xf32> to vector<8x8xf32>
    %119 = arith.truncf %118 : vector<8x8xf32> to vector<8x8xbf16>
    %c8_26 = arith.constant 8 : index
    %c8_27 = arith.constant 8 : index
    %120 = vector.load %arg17[%c8_26, %c8_27] : memref<16x32xbf16, #tpu.memory_space<vmem>>, vector<8x8xbf16>
    tpu.vector_store %arg17[%c8_26, %c8_27], %119 {strides = array<i32>} : memref<16x32xbf16, #tpu.memory_space<vmem>>, vector<8x8xbf16>,
    %121 = vector.extract_strided_slice %96 {offsets = [6, 0, 0], sizes = [1, 8, 8], strides = [1, 1, 1]} : vector<8x8x8xf32> to vector<1x8x8xf32>
    %122 = vector.shape_cast %121 : vector<1x8x8xf32> to vector<8x8xf32>
    %123 = arith.truncf %122 : vector<8x8xf32> to vector<8x8xbf16>
    %c8_28 = arith.constant 8 : index
    %c16_29 = arith.constant 16 : index
    %124 = vector.load %arg17[%c8_28, %c16_29] : memref<16x32xbf16, #tpu.memory_space<vmem>>, vector<8x8xbf16>
    tpu.vector_store %arg17[%c8_28, %c16_29], %123 {strides = array<i32>} : memref<16x32xbf16, #tpu.memory_space<vmem>>, vector<8x8xbf16>,
    %125 = vector.extract_strided_slice %96 {offsets = [7, 0, 0], sizes = [1, 8, 8], strides = [1, 1, 1]} : vector<8x8x8xf32> to vector<1x8x8xf32>
    %126 = vector.shape_cast %125 : vector<1x8x8xf32> to vector<8x8xf32>
    %127 = arith.truncf %126 : vector<8x8xf32> to vector<8x8xbf16>
    %c8_30 = arith.constant 8 : index
    %c24_31 = arith.constant 24 : index
    %128 = vector.load %arg17[%c8_30, %c24_31] : memref<16x32xbf16, #tpu.memory_space<vmem>>, vector<8x8xbf16>
    tpu.vector_store %arg17[%c8_30, %c24_31], %127 {strides = array<i32>} : memref<16x32xbf16, #tpu.memory_space<vmem>>, vector<8x8xbf16>,
    %c0_32 = arith.constant 0 : index
    %c0_33 = arith.constant 0 : index
    %129 = vector.load %arg17[%c0_32, %c0_33] : memref<16x32xbf16, #tpu.memory_space<vmem>>, vector<16x32xbf16>
    %c0_34 = arith.constant 0 : index
    %c0_35 = arith.constant 0 : index
    %c0_36 = arith.constant 0 : index
    %130 = vector.load %arg6[%c0_34, %c0_35, %c0_36] : memref<1x32x32xbf16, #tpu.memory_space<vmem>>, vector<1x32x32xbf16>
    %131 = vector.shape_cast %130 : vector<1x32x32xbf16> to vector<32x32xbf16>
    %cst_37 = arith.constant dense<0.000000e+00> : vector<16x32xf32>
    %132 = tpu.matmul %129, %131, %cst_37 {dimension_numbers = #tpu.dot_dimension_numbers<[1], [0], [0], [1], [0, 0, 1, 1], [], []>} : vector<16x32xbf16>, vector<32x32xbf16>, vector<16x32xf32> -> vector<16x32xf32>
    %c0_38 = arith.constant 0 : index
    %c0_39 = arith.constant 0 : index
    %c0_40 = arith.constant 0 : index
    %133 = vector.load %arg7[%c0_38, %c0_39, %c0_40] : memref<1x1x32xf32, #tpu.memory_space<vmem>>, vector<1x1x32xf32>
    %134 = vector.shape_cast %133 : vector<1x1x32xf32> to vector<1x32xf32>
    %135 = vector.broadcast %134 : vector<1x32xf32> to vector<16x32xf32>
    %136 = arith.addf %132, %135 : vector<16x32xf32>
    %137 = arith.addf %4, %136 : vector<16x32xf32>
    %c0_41 = arith.constant 0 : index
    %c0_42 = arith.constant 0 : index
    %c0_43 = arith.constant 0 : index
    %138 = vector.load %arg8[%c0_41, %c0_42, %c0_43] : memref<1x1x32xf32, #tpu.memory_space<vmem>>, vector<1x1x32xf32>
    %139 = vector.shape_cast %138 : vector<1x1x32xf32> to vector<1x32xf32>
    %c0_44 = arith.constant 0 : index
    %c0_45 = arith.constant 0 : index
    %c0_46 = arith.constant 0 : index
    %140 = vector.load %arg9[%c0_44, %c0_45, %c0_46] : memref<1x1x32xf32, #tpu.memory_space<vmem>>, vector<1x1x32xf32>
    %141 = vector.shape_cast %140 : vector<1x1x32xf32> to vector<1x32xf32>
    %cst_47 = arith.constant dense<0.000000e+00> : vector<16xf32>
    %142 = vector.multi_reduction <add>, %137, %cst_47 [1] : vector<16x32xf32> to vector<16xf32>
    %143 = vector.shape_cast %142 : vector<16xf32> to vector<16x1xf32>
    %cst_48 = arith.constant 3.200000e+01 : f32
    %144 = vector.broadcast %cst_48 : f32 to vector<16x1xf32>
    %145 = arith.divf %143, %144 : vector<16x1xf32>
    %146 = vector.broadcast %145 : vector<16x1xf32> to vector<16x32xf32>
    %147 = arith.subf %137, %146 : vector<16x32xf32>
    %148 = arith.mulf %147, %147 : vector<16x32xf32>
    %cst_49 = arith.constant dense<0.000000e+00> : vector<16xf32>
    %149 = vector.multi_reduction <add>, %148, %cst_49 [1] : vector<16x32xf32> to vector<16xf32>
    %150 = vector.shape_cast %149 : vector<16xf32> to vector<16x1xf32>
    %cst_50 = arith.constant 3.200000e+01 : f32
    %151 = vector.broadcast %cst_50 : f32 to vector<16x1xf32>
    %152 = arith.divf %150, %151 : vector<16x1xf32>
    %153 = vector.broadcast %145 : vector<16x1xf32> to vector<16x32xf32>
    %154 = arith.subf %137, %153 : vector<16x32xf32>
    %cst_51 = arith.constant 9.99999974E-6 : f32
    %155 = vector.broadcast %cst_51 : f32 to vector<16x1xf32>
    %156 = arith.addf %152, %155 : vector<16x1xf32>
    %157 = math.rsqrt %156 : vector<16x1xf32>
    %158 = vector.broadcast %157 : vector<16x1xf32> to vector<16x32xf32>
    %159 = arith.mulf %154, %158 : vector<16x32xf32>
    %160 = vector.broadcast %139 : vector<1x32xf32> to vector<16x32xf32>
    %161 = arith.mulf %159, %160 : vector<16x32xf32>
    %162 = vector.broadcast %141 : vector<1x32xf32> to vector<16x32xf32>
    %163 = arith.addf %161, %162 : vector<16x32xf32>
    %164 = arith.truncf %163 : vector<16x32xf32> to vector<16x32xbf16>
    %c0_52 = arith.constant 0 : index
    %c0_53 = arith.constant 0 : index
    %c0_54 = arith.constant 0 : index
    %165 = vector.load %arg10[%c0_52, %c0_53, %c0_54] : memref<1x32x64xbf16, #tpu.memory_space<vmem>>, vector<1x32x64xbf16>
    %166 = vector.shape_cast %165 : vector<1x32x64xbf16> to vector<32x64xbf16>
    %cst_55 = arith.constant dense<0.000000e+00> : vector<16x64xf32>
    %167 = tpu.matmul %164, %166, %cst_55 {dimension_numbers = #tpu.dot_dimension_numbers<[1], [0], [0], [1], [0, 0, 1, 1], [], []>} : vector<16x32xbf16>, vector<32x64xbf16>, vector<16x64xf32> -> vector<16x64xf32>
    %c0_56 = arith.constant 0 : index
    %c0_57 = arith.constant 0 : index
    %c0_58 = arith.constant 0 : index
    %168 = vector.load %arg11[%c0_56, %c0_57, %c0_58] : memref<1x1x64xf32, #tpu.memory_space<vmem>>, vector<1x1x64xf32>
    %169 = vector.shape_cast %168 : vector<1x1x64xf32> to vector<1x64xf32>
    %170 = vector.broadcast %169 : vector<1x64xf32> to vector<16x64xf32>
    %171 = arith.addf %167, %170 : vector<16x64xf32>
    %cst_59 = arith.constant 0.000000e+00 : f32
    %172 = vector.broadcast %cst_59 : f32 to vector<16x64xf32>
    %173 = arith.maximumf %171, %172 : vector<16x64xf32>
    %174 = arith.truncf %173 : vector<16x64xf32> to vector<16x64xbf16>
    %c0_60 = arith.constant 0 : index
    %c0_61 = arith.constant 0 : index
    %c0_62 = arith.constant 0 : index
    %175 = vector.load %arg12[%c0_60, %c0_61, %c0_62] : memref<1x64x32xbf16, #tpu.memory_space<vmem>>, vector<1x64x32xbf16>
    %176 = vector.shape_cast %175 : vector<1x64x32xbf16> to vector<64x32xbf16>
    %cst_63 = arith.constant dense<0.000000e+00> : vector<16x32xf32>
    %177 = tpu.matmul %174, %176, %cst_63 {dimension_numbers = #tpu.dot_dimension_numbers<[1], [0], [0], [1], [0, 0, 1, 1], [], []>} : vector<16x64xbf16>, vector<64x32xbf16>, vector<16x32xf32> -> vector<16x32xf32>
    %c0_64 = arith.constant 0 : index
    %c0_65 = arith.constant 0 : index
    %c0_66 = arith.constant 0 : index
    %178 = vector.load %arg13[%c0_64, %c0_65, %c0_66] : memref<1x1x32xf32, #tpu.memory_space<vmem>>, vector<1x1x32xf32>
    %179 = vector.shape_cast %178 : vector<1x1x32xf32> to vector<1x32xf32>
    %180 = vector.broadcast %179 : vector<1x32xf32> to vector<16x32xf32>
    %181 = arith.addf %177, %180 : vector<16x32xf32>
    %182 = arith.addf %163, %181 : vector<16x32xf32>
    %c0_67 = arith.constant 0 : index
    %c0_68 = arith.constant 0 : index
    %c0_69 = arith.constant 0 : index
    %183 = vector.load %arg14[%c0_67, %c0_68, %c0_69] : memref<1x1x32xf32, #tpu.memory_space<vmem>>, vector<1x1x32xf32>
    %184 = vector.shape_cast %183 : vector<1x1x32xf32> to vector<1x32xf32>
    %c0_70 = arith.constant 0 : index
    %c0_71 = arith.constant 0 : index
    %c0_72 = arith.constant 0 : index
    %185 = vector.load %arg15[%c0_70, %c0_71, %c0_72] : memref<1x1x32xf32, #tpu.memory_space<vmem>>, vector<1x1x32xf32>
    %186 = vector.shape_cast %185 : vector<1x1x32xf32> to vector<1x32xf32>
    %cst_73 = arith.constant dense<0.000000e+00> : vector<16xf32>
    %187 = vector.multi_reduction <add>, %182, %cst_73 [1] : vector<16x32xf32> to vector<16xf32>
    %188 = vector.shape_cast %187 : vector<16xf32> to vector<16x1xf32>
    %cst_74 = arith.constant 3.200000e+01 : f32
    %189 = vector.broadcast %cst_74 : f32 to vector<16x1xf32>
    %190 = arith.divf %188, %189 : vector<16x1xf32>
    %191 = vector.broadcast %190 : vector<16x1xf32> to vector<16x32xf32>
    %192 = arith.subf %182, %191 : vector<16x32xf32>
    %193 = arith.mulf %192, %192 : vector<16x32xf32>
    %cst_75 = arith.constant dense<0.000000e+00> : vector<16xf32>
    %194 = vector.multi_reduction <add>, %193, %cst_75 [1] : vector<16x32xf32> to vector<16xf32>
    %195 = vector.shape_cast %194 : vector<16xf32> to vector<16x1xf32>
    %cst_76 = arith.constant 3.200000e+01 : f32
    %196 = vector.broadcast %cst_76 : f32 to vector<16x1xf32>
    %197 = arith.divf %195, %196 : vector<16x1xf32>
    %198 = vector.broadcast %190 : vector<16x1xf32> to vector<16x32xf32>
    %199 = arith.subf %182, %198 : vector<16x32xf32>
    %cst_77 = arith.constant 9.99999974E-6 : f32
    %200 = vector.broadcast %cst_77 : f32 to vector<16x1xf32>
    %201 = arith.addf %197, %200 : vector<16x1xf32>
    %202 = math.rsqrt %201 : vector<16x1xf32>
    %203 = vector.broadcast %202 : vector<16x1xf32> to vector<16x32xf32>
    %204 = arith.mulf %199, %203 : vector<16x32xf32>
    %205 = vector.broadcast %184 : vector<1x32xf32> to vector<16x32xf32>
    %206 = arith.mulf %204, %205 : vector<16x32xf32>
    %207 = vector.broadcast %186 : vector<1x32xf32> to vector<16x32xf32>
    %208 = arith.addf %206, %207 : vector<16x32xf32>
    %209 = vector.shape_cast %208 : vector<16x32xf32> to vector<2x8x32xf32>
    %c0_78 = arith.constant 0 : index
    %c0_79 = arith.constant 0 : index
    %c0_80 = arith.constant 0 : index
    %210 = vector.load %arg16[%c0_78, %c0_79, %c0_80] : memref<2x8x32xf32, #tpu.memory_space<vmem>>, vector<2x8x32xf32>
    tpu.vector_store %arg16[%c0_78, %c0_79, %c0_80], %209 {strides = array<i32>} : memref<2x8x32xf32, #tpu.memory_space<vmem>>, vector<2x8x32xf32>,
    return
  }
  func.func @transform_0(%arg0: i32, %arg1: i32) -> (i32, i32, i32) {
    %c0_i32 = arith.constant 0 : i32
    %c0_i32_0 = arith.constant 0 : i32
    %c0_i32_1 = arith.constant 0 : i32
    return %arg0, %c0_i32, %c0_i32_0 : i32, i32, i32
  }
  func.func @transform_1(%arg0: i32, %arg1: i32) -> (i32, i32, i32) {
    %c0_i32 = arith.constant 0 : i32
    %c0_i32_0 = arith.constant 0 : i32
    %c0_i32_1 = arith.constant 0 : i32
    return %arg0, %c0_i32, %c0_i32_0 : i32, i32, i32
  }
  func.func @transform_2(%arg0: i32, %arg1: i32) -> (i32, i32, i32) {
    %c0_i32 = arith.constant 0 : i32
    %c0_i32_0 = arith.constant 0 : i32
    %c0_i32_1 = arith.constant 0 : i32
    return %arg1, %c0_i32, %c0_i32_0 : i32, i32, i32
  }
  func.func @transform_3(%arg0: i32, %arg1: i32) -> (i32, i32, i32) {
    %c0_i32 = arith.constant 0 : i32
    %c0_i32_0 = arith.constant 0 : i32
    %c0_i32_1 = arith.constant 0 : i32
    return %arg1, %c0_i32, %c0_i32_0 : i32, i32, i32
  }
  func.func @transform_4(%arg0: i32, %arg1: i32) -> (i32, i32, i32) {
    %c0_i32 = arith.constant 0 : i32
    %c0_i32_0 = arith.constant 0 : i32
    %c0_i32_1 = arith.constant 0 : i32
    return %arg1, %c0_i32, %c0_i32_0 : i32, i32, i32
  }
  func.func @transform_5(%arg0: i32, %arg1: i32) -> (i32, i32, i32) {
    %c0_i32 = arith.constant 0 : i32
    %c0_i32_0 = arith.constant 0 : i32
    %c0_i32_1 = arith.constant 0 : i32
    return %arg1, %c0_i32, %c0_i32_0 : i32, i32, i32
  }
  func.func @transform_6(%arg0: i32, %arg1: i32) -> (i32, i32, i32) {
    %c0_i32 = arith.constant 0 : i32
    %c0_i32_0 = arith.constant 0 : i32
    %c0_i32_1 = arith.constant 0 : i32
    return %arg1, %c0_i32, %c0_i32_0 : i32, i32, i32
  }
  func.func @transform_7(%arg0: i32, %arg1: i32) -> (i32, i32, i32) {
    %c0_i32 = arith.constant 0 : i32
    %c0_i32_0 = arith.constant 0 : i32
    %c0_i32_1 = arith.constant 0 : i32
    return %arg1, %c0_i32, %c0_i32_0 : i32, i32, i32
  }
  func.func @transform_8(%arg0: i32, %arg1: i32) -> (i32, i32, i32) {
    %c0_i32 = arith.constant 0 : i32
    %c0_i32_0 = arith.constant 0 : i32
    %c0_i32_1 = arith.constant 0 : i32
    return %arg1, %c0_i32, %c0_i32_0 : i32, i32, i32
  }
  func.func @transform_9(%arg0: i32, %arg1: i32) -> (i32, i32, i32) {
    %c0_i32 = arith.constant 0 : i32
    %c0_i32_0 = arith.constant 0 : i32
    %c0_i32_1 = arith.constant 0 : i32
    return %arg1, %c0_i32, %c0_i32_0 : i32, i32, i32
  }
  func.func @transform_10(%arg0: i32, %arg1: i32) -> (i32, i32, i32) {
    %c0_i32 = arith.constant 0 : i32
    %c0_i32_0 = arith.constant 0 : i32
    %c0_i32_1 = arith.constant 0 : i32
    return %arg1, %c0_i32, %c0_i32_0 : i32, i32, i32
  }
  func.func @transform_11(%arg0: i32, %arg1: i32) -> (i32, i32, i32) {
    %c0_i32 = arith.constant 0 : i32
    %c0_i32_0 = arith.constant 0 : i32
    %c0_i32_1 = arith.constant 0 : i32
    return %arg1, %c0_i32, %c0_i32_0 : i32, i32, i32
  }
  func.func @transform_12(%arg0: i32, %arg1: i32) -> (i32, i32, i32) {
    %c0_i32 = arith.constant 0 : i32
    %c0_i32_0 = arith.constant 0 : i32
    %c0_i32_1 = arith.constant 0 : i32
    return %arg1, %c0_i32, %c0_i32_0 : i32, i32, i32
  }
  func.func @transform_13(%arg0: i32, %arg1: i32) -> (i32, i32, i32) {
    %c0_i32 = arith.constant 0 : i32
    %c0_i32_0 = arith.constant 0 : i32
    %c0_i32_1 = arith.constant 0 : i32
    return %arg1, %c0_i32, %c0_i32_0 : i32, i32, i32
  }
  func.func @transform_14(%arg0: i32, %arg1: i32) -> (i32, i32, i32) {
    %c0_i32 = arith.constant 0 : i32
    %c0_i32_0 = arith.constant 0 : i32
    %c0_i32_1 = arith.constant 0 : i32
    return %arg0, %c0_i32, %c0_i32_0 : i32, i32, i32
  }
}

</mosaic_0001>

<llo_original>
// kernel: hawkes_transformer_forward.1
$region0: #{hawkes_transformer_forward.1}
  #allocation0 [shape = 'u32[]', space=smem, size = 0x4, offset = 0x4, fixed_abs, tag = 'smem constant byte address 0x4 - core index']
  #allocation1 [shape = 'u32[144,128]{1,0:T(1,128)}', space=vmem, size = 0x12000, scoped, tag = 'internal scratch']
  #allocation2 [shape = 'bf16[16,32]{1,0:T(8,128)(2,1)}', space=vmem, size = 0x1000, scoped, tag = 'scratch operand']
  %s0 = inlined_call_operand.vmem [shape: f32[2,8,32], index: 0, kind: input, shape index: {}]
  %s1 = inlined_call_operand.vmem [shape: f32[2,1,8], index: 1, kind: input, shape index: {}]
  %s2 = inlined_call_operand.vmem [shape: bf16[2,32,96], index: 2, kind: input, shape index: {}]
  %s3 = inlined_call_operand.vmem [shape: f32[2,1,96], index: 3, kind: input, shape index: {}]
  %s4 = inlined_call_operand.vmem [shape: bf16[2,32,32], index: 4, kind: input, shape index: {}]
  %s5 = inlined_call_operand.vmem [shape: f32[2,1,32], index: 5, kind: input, shape index: {}]
  %s6 = inlined_call_operand.vmem [shape: f32[2,1,32], index: 6, kind: input, shape index: {}]
  %s7 = inlined_call_operand.vmem [shape: f32[2,1,32], index: 7, kind: input, shape index: {}]
  %s8 = inlined_call_operand.vmem [shape: bf16[2,32,64], index: 8, kind: input, shape index: {}]
  %s9 = inlined_call_operand.vmem [shape: f32[2,1,64], index: 9, kind: input, shape index: {}]
  %s10 = inlined_call_operand.vmem [shape: bf16[2,64,32], index: 10, kind: input, shape index: {}]
  %s11 = inlined_call_operand.vmem [shape: f32[2,1,32], index: 11, kind: input, shape index: {}]
  %s12 = inlined_call_operand.vmem [shape: f32[2,1,32], index: 12, kind: input, shape index: {}]
  %s13 = inlined_call_operand.vmem [shape: f32[2,1,32], index: 13, kind: input, shape index: {}]
  %s14 = inlined_call_operand.vmem [shape: f32[2,8,32], index: 14, kind: output, shape index: {}]
  %s15 = sld [smem:[#allocation0]]
  $region93: #{hawkes_transformer_forward.1} parent=0
    _
  %s17 = ssub.s32 1, %s15
  %s18 = scalar_select 0, %s17, %s15
  loop: start=0, step=1, limit=4
  $region2: #{hawkes_transformer_forward.1} parent=0 // loop_pre_header
    _
  $region3: #{hawkes_transformer_forward.1} parent=0 // loop_header
    %s20 = sphi 0, %s24
    %p21 = scmp.ge.s32.totalorder %s20, 4
    %s27 = sphi 0, %s39
    %s28 = sphi 0, %s35
    %s29 = sphi 0, %s27
    %s30 = sphi 0, %s28
    %s31 = sphi 0, %s29
    %s32 = sphi 0, %s30
    %s42 = sphi 0, %s44
    %s45 = sphi 0, %s42
    %s46 = sphi 0, %s45
    %s62 = sphi 0, %s46
    %s68 = sphi 0, %s70
    %s71 = sphi 0, %s68
    %s72 = sphi 0, %s71
    %s88 = sphi 0, %s72
    %s94 = sphi 0, %s96
    %s97 = sphi 0, %s94
    %s98 = sphi 0, %s97
    %s114 = sphi 0, %s98
    %s120 = sphi 0, %s122
    %s123 = sphi 0, %s120
    %s124 = sphi 0, %s123
    %s140 = sphi 0, %s124
    %s146 = sphi 0, %s148
    %s149 = sphi 0, %s146
    %s150 = sphi 0, %s149
    %s166 = sphi 0, %s150
    %s172 = sphi 0, %s174
    %s175 = sphi 0, %s172
    %s176 = sphi 0, %s175
    %s192 = sphi 0, %s176
    %s198 = sphi 0, %s200
    %s201 = sphi 0, %s198
    %s202 = sphi 0, %s201
    %s218 = sphi 0, %s202
    %s224 = sphi 0, %s226
    %s227 = sphi 0, %s224
    %s228 = sphi 0, %s227
    %s244 = sphi 0, %s228
    %s250 = sphi 0, %s252
    %s253 = sphi 0, %s250
    %s254 = sphi 0, %s253
    %s270 = sphi 0, %s254
    %s276 = sphi 0, %s278
    %s279 = sphi 0, %s276
    %s280 = sphi 0, %s279
    %s296 = sphi 0, %s280
    %s302 = sphi 0, %s304
    %s305 = sphi 0, %s302
    %s306 = sphi 0, %s305
    %s322 = sphi 0, %s306
    %s328 = sphi 0, %s330
    %s331 = sphi 0, %s328
    %s332 = sphi 0, %s331
    %s348 = sphi 0, %s332
    %s354 = sphi 0, %s356
    %s357 = sphi 0, %s354
    %s358 = sphi 0, %s357
    %s374 = sphi 0, %s358
    %s380 = sphi 0, %s382
    %s383 = sphi 0, %s380
    %s384 = sphi 0, %s383
    %s400 = sphi 0, %s384
    %s406 = sphi 0, %s408
    %s409 = sphi 0, %s406
    %s410 = sphi 0, %s409
    %s426 = sphi 0, %s410
  $region4: #{hawkes_transformer_forward.1} parent=0 // loop_header_branch
    %23 = sbr.rel (%p21) target = $region8
  $region5: #{hawkes_transformer_forward.1} parent=0 // loop_body
    %s25 = ssub.s32 %s20, 1
    %s26 = ssub.s32 %s20, 2
    %s33 = sadd.s32 1, %s28
    %p34 = scmp.ge.s32.totalorder %s33, 2
    %s35 = scalar_select %p34, 0, %s33
    %s36 = sadd.s32 1, %s27
    %s37 = scalar_select %p34, %s36, %s27
    %p38 = scmp.ge.s32.totalorder %s37, 1
    %s39 = scalar_select %p38, 0, %s37
    %s40 = ssub.s32 %s27, %s39
    %p41 = scmp.eq.s32.totalorder %s40, 0
    %s43 = sadd.s32 %s42, 1
    %s44 = scalar_select %p41, %s42, %s43
    %p47 = pneg %p41
    %p48 = scmp.eq.s32.totalorder %s20, 1
    %p49 = por %p47, %p48
    %p50 = scmp.ne.s32.totalorder %s42, %s45
    %p51 = scmp.eq.s32.totalorder %s20, 0
    %p52 = por %p50, %p51
    %p53 = scmp.ne.s32.totalorder %s42, %s45
    %p54 = scmp.eq.s32.totalorder %s25, 1
    %p55 = por %p53, %p54
    %p56 = scmp.ne.s32.totalorder %s45, %s46
    %p57 = scmp.eq.s32.totalorder %s25, 0
    %p58 = por %p56, %p57
    %p59 = scmp.ne.s32.totalorder %s45, %s46
    %p60 = scmp.eq.s32.totalorder %s26, 1
    %p61 = por %p59, %p60
    %p63 = scmp.ne.s32.totalorder %s46, %s62
    %p64 = scmp.eq.s32.totalorder %s26, 0
    %p65 = por %p63, %p64
    %s66 = ssub.s32 %s27, %s39
    %p67 = scmp.eq.s32.totalorder %s66, 0
    %s69 = sadd.s32 %s68, 1
    %s70 = scalar_select %p67, %s68, %s69
    %p73 = pneg %p67
    %p74 = scmp.eq.s32.totalorder %s20, 1
    %p75 = por %p73, %p74
    %p76 = scmp.ne.s32.totalorder %s68, %s71
    %p77 = scmp.eq.s32.totalorder %s20, 0
    %p78 = por %p76, %p77
    %p79 = scmp.ne.s32.totalorder %s68, %s71
    %p80 = scmp.eq.s32.totalorder %s25, 1
    %p81 = por %p79, %p80
    %p82 = scmp.ne.s32.totalorder %s71, %s72
    %p83 = scmp.eq.s32.totalorder %s25, 0
    %p84 = por %p82, %p83
    %p85 = scmp.ne.s32.totalorder %s71, %s72
    %p86 = scmp.eq.s32.totalorder %s26, 1
    %p87 = por %p85, %p86
    %p89 = scmp.ne.s32.totalorder %s72, %s88
    %p90 = scmp.eq.s32.totalorder %s26, 0
    %p91 = por %p89, %p90
    %s92 = ssub.s32 %s28, %s35
    %p93 = scmp.eq.s32.totalorder %s92, 0
    %s95 = sadd.s32 %s94, 1
    %s96 = scalar_select %p93, %s94, %s95
    %p99 = pneg %p93
    %p100 = scmp.eq.s32.totalorder %s20, 1
    %p101 = por %p99, %p100
    %p102 = scmp.ne.s32.totalorder %s94, %s97
    %p103 = scmp.eq.s32.totalorder %s20, 0
    %p104 = por %p102, %p103
    %p105 = scmp.ne.s32.totalorder %s94, %s97
    %p106 = scmp.eq.s32.totalorder %s25, 1
    %p107 = por %p105, %p106
    %p108 = scmp.ne.s32.totalorder %s97, %s98
    %p109 = scmp.eq.s32.totalorder %s25, 0
    %p110 = por %p108, %p109
    %p111 = scmp.ne.s32.totalorder %s97, %s98
    %p112 = scmp.eq.s32.totalorder %s26, 1
    %p113 = por %p111, %p112
    %p115 = scmp.ne.s32.totalorder %s98, %s114
    %p116 = scmp.eq.s32.totalorder %s26, 0
    %p117 = por %p115, %p116
    %s118 = ssub.s32 %s28, %s35
    %p119 = scmp.eq.s32.totalorder %s118, 0
    %s121 = sadd.s32 %s120, 1
    %s122 = scalar_select %p119, %s120, %s121
    %p125 = pneg %p119
    %p126 = scmp.eq.s32.totalorder %s20, 1
    %p127 = por %p125, %p126
    %p128 = scmp.ne.s32.totalorder %s120, %s123
    %p129 = scmp.eq.s32.totalorder %s20, 0
    %p130 = por %p128, %p129
    %p131 = scmp.ne.s32.totalorder %s120, %s123
    %p132 = scmp.eq.s32.totalorder %s25, 1
    %p133 = por %p131, %p132
    %p134 = scmp.ne.s32.totalorder %s123, %s124
    %p135 = scmp.eq.s32.totalorder %s25, 0
    %p136 = por %p134, %p135
    %p137 = scmp.ne.s32.totalorder %s123, %s124
    %p138 = scmp.eq.s32.totalorder %s26, 1
    %p139 = por %p137, %p138
    %p141 = scmp.ne.s32.totalorder %s124, %s140
    %p142 = scmp.eq.s32.totalorder %s26, 0
    %p143 = por %p141, %p142
    %s144 = ssub.s32 %s28, %s35
    %p145 = scmp.eq.s32.totalorder %s144, 0
    %s147 = sadd.s32 %s146, 1
    %s148 = scalar_select %p145, %s146, %s147
    %p151 = pneg %p145
    %p152 = scmp.eq.s32.totalorder %s20, 1
    %p153 = por %p151, %p152
    %p154 = scmp.ne.s32.totalorder %s146, %s149
    %p155 = scmp.eq.s32.totalorder %s20, 0
    %p156 = por %p154, %p155
    %p157 = scmp.ne.s32.totalorder %s146, %s149
    %p158 = scmp.eq.s32.totalorder %s25, 1
    %p159 = por %p157, %p158
    %p160 = scmp.ne.s32.totalorder %s149, %s150
    %p161 = scmp.eq.s32.totalorder %s25, 0
    %p162 = por %p160, %p161
    %p163 = scmp.ne.s32.totalorder %s149, %s150
    %p164 = scmp.eq.s32.totalorder %s26, 1
    %p165 = por %p163, %p164
    %p167 = scmp.ne.s32.totalorder %s150, %s166
    %p168 = scmp.eq.s32.totalorder %s26, 0
    %p169 = por %p167, %p168
    %s170 = ssub.s32 %s28, %s35
    %p171 = scmp.eq.s32.totalorder %s170, 0
    %s173 = sadd.s32 %s172, 1
    %s174 = scalar_select %p171, %s172, %s173
    %p177 = pneg %p171
    %p178 = scmp.eq.s32.totalorder %s20, 1
    %p179 = por %p177, %p178
    %p180 = scmp.ne.s32.totalorder %s172, %s175
    %p181 = scmp.eq.s32.totalorder %s20, 0
    %p182 = por %p180, %p181
    %p183 = scmp.ne.s32.totalorder %s172, %s175
    %p184 = scmp.eq.s32.totalorder %s25, 1
    %p185 = por %p183, %p184
    %p186 = scmp.ne.s32.totalorder %s175, %s176
    %p187 = scmp.eq.s32.totalorder %s25, 0
    %p188 = por %p186, %p187
    %p189 = scmp.ne.s32.totalorder %s175, %s176
    %p190 = scmp.eq.s32.totalorder %s26, 1
    %p191 = por %p189, %p190
    %p193 = scmp.ne.s32.totalorder %s176, %s192
    %p194 = scmp.eq.s32.totalorder %s26, 0
    %p195 = por %p193, %p194
    %s196 = ssub.s32 %s28, %s35
    %p197 = scmp.eq.s32.totalorder %s196, 0
    %s199 = sadd.s32 %s198, 1
    %s200 = scalar_select %p197, %s198, %s199
    %p203 = pneg %p197
    %p204 = scmp.eq.s32.totalorder %s20, 1
    %p205 = por %p203, %p204
    %p206 = scmp.ne.s32.totalorder %s198, %s201
    %p207 = scmp.eq.s32.totalorder %s20, 0
    %p208 = por %p206, %p207
    %p209 = scmp.ne.s32.totalorder %s198, %s201
    %p210 = scmp.eq.s32.totalorder %s25, 1
    %p211 = por %p209, %p210
    %p212 = scmp.ne.s32.totalorder %s201, %s202
    %p213 = scmp.eq.s32.totalorder %s25, 0
    %p214 = por %p212, %p213
    %p215 = scmp.ne.s32.totalorder %s201, %s202
    %p216 = scmp.eq.s32.totalorder %s26, 1
    %p217 = por %p215, %p216
    %p219 = scmp.ne.s32.totalorder %s202, %s218
    %p220 = scmp.eq.s32.totalorder %s26, 0
    %p221 = por %p219, %p220
    %s222 = ssub.s32 %s28, %s35
    %p223 = scmp.eq.s32.totalorder %s222, 0
    %s225 = sadd.s32 %s224, 1
    %s226 = scalar_select %p223, %s224, %s225
    %p229 = pneg %p223
    %p230 = scmp.eq.s32.totalorder %s20, 1
    %p231 = por %p229, %p230
    %p232 = scmp.ne.s32.totalorder %s224, %s227
    %p233 = scmp.eq.s32.totalorder %s20, 0
    %p234 = por %p232, %p233
    %p235 = scmp.ne.s32.totalorder %s224, %s227
    %p236 = scmp.eq.s32.totalorder %s25, 1
    %p237 = por %p235, %p236
    %p238 = scmp.ne.s32.totalorder %s227, %s228
    %p239 = scmp.eq.s32.totalorder %s25, 0
    %p240 = por %p238, %p239
    %p241 = scmp.ne.s32.totalorder %s227, %s228
    %p242 = scmp.eq.s32.totalorder %s26, 1
    %p243 = por %p241, %p242
    %p245 = scmp.ne.s32.totalorder %s228, %s244
    %p246 = scmp.eq.s32.totalorder %s26, 0
    %p247 = por %p245, %p246
    %s248 = ssub.s32 %s28, %s35
    %p249 = scmp.eq.s32.totalorder %s248, 0
    %s251 = sadd.s32 %s250, 1
    %s252 = scalar_select %p249, %s250, %s251
    %p255 = pneg %p249
    %p256 = scmp.eq.s32.totalorder %s20, 1
    %p257 = por %p255, %p256
    %p258 = scmp.ne.s32.totalorder %s250, %s253
    %p259 = scmp.eq.s32.totalorder %s20, 0
    %p260 = por %p258, %p259
    %p261 = scmp.ne.s32.totalorder %s250, %s253
    %p262 = scmp.eq.s32.totalorder %s25, 1
    %p263 = por %p261, %p262
    %p264 = scmp.ne.s32.totalorder %s253, %s254
    %p265 = scmp.eq.s32.totalorder %s25, 0
    %p266 = por %p264, %p265
    %p267 = scmp.ne.s32.totalorder %s253, %s254
    %p268 = scmp.eq.s32.totalorder %s26, 1
    %p269 = por %p267, %p268
    %p271 = scmp.ne.s32.totalorder %s254, %s270
    %p272 = scmp.eq.s32.totalorder %s26, 0
    %p273 = por %p271, %p272
    %s274 = ssub.s32 %s28, %s35
    %p275 = scmp.eq.s32.totalorder %s274, 0
    %s277 = sadd.s32 %s276, 1
    %s278 = scalar_select %p275, %s276, %s277
    %p281 = pneg %p275
    %p282 = scmp.eq.s32.totalorder %s20, 1
    %p283 = por %p281, %p282
    %p284 = scmp.ne.s32.totalorder %s276, %s279
    %p285 = scmp.eq.s32.totalorder %s20, 0
    %p286 = por %p284, %p285
    %p287 = scmp.ne.s32.totalorder %s276, %s279
    %p288 = scmp.eq.s32.totalorder %s25, 1
    %p289 = por %p287, %p288
    %p290 = scmp.ne.s32.totalorder %s279, %s280
    %p291 = scmp.eq.s32.totalorder %s25, 0
    %p292 = por %p290, %p291
    %p293 = scmp.ne.s32.totalorder %s279, %s280
    %p294 = scmp.eq.s32.totalorder %s26, 1
    %p295 = por %p293, %p294
    %p297 = scmp.ne.s32.totalorder %s280, %s296
    %p298 = scmp.eq.s32.totalorder %s26, 0
    %p299 = por %p297, %p298
    %s300 = ssub.s32 %s28, %s35
    %p301 = scmp.eq.s32.totalorder %s300, 0
    %s303 = sadd.s32 %s302, 1
    %s304 = scalar_select %p301, %s302, %s303
    %p307 = pneg %p301
    %p308 = scmp.eq.s32.totalorder %s20, 1
    %p309 = por %p307, %p308
    %p310 = scmp.ne.s32.totalorder %s302, %s305
    %p311 = scmp.eq.s32.totalorder %s20, 0
    %p312 = por %p310, %p311
    %p313 = scmp.ne.s32.totalorder %s302, %s305
    %p314 = scmp.eq.s32.totalorder %s25, 1
    %p315 = por %p313, %p314
    %p316 = scmp.ne.s32.totalorder %s305, %s306
    %p317 = scmp.eq.s32.totalorder %s25, 0
    %p318 = por %p316, %p317
    %p319 = scmp.ne.s32.totalorder %s305, %s306
    %p320 = scmp.eq.s32.totalorder %s26, 1
    %p321 = por %p319, %p320
    %p323 = scmp.ne.s32.totalorder %s306, %s322
    %p324 = scmp.eq.s32.totalorder %s26, 0
    %p325 = por %p323, %p324
    %s326 = ssub.s32 %s28, %s35
    %p327 = scmp.eq.s32.totalorder %s326, 0
    %s329 = sadd.s32 %s328, 1
    %s330 = scalar_select %p327, %s328, %s329
    %p333 = pneg %p327
    %p334 = scmp.eq.s32.totalorder %s20, 1
    %p335 = por %p333, %p334
    %p336 = scmp.ne.s32.totalorder %s328, %s331
    %p337 = scmp.eq.s32.totalorder %s20, 0
    %p338 = por %p336, %p337
    %p339 = scmp.ne.s32.totalorder %s328, %s331
    %p340 = scmp.eq.s32.totalorder %s25, 1
    %p341 = por %p339, %p340
    %p342 = scmp.ne.s32.totalorder %s331, %s332
    %p343 = scmp.eq.s32.totalorder %s25, 0
    %p344 = por %p342, %p343
    %p345 = scmp.ne.s32.totalorder %s331, %s332
    %p346 = scmp.eq.s32.totalorder %s26, 1
    %p347 = por %p345, %p346
    %p349 = scmp.ne.s32.totalorder %s332, %s348
    %p350 = scmp.eq.s32.totalorder %s26, 0
    %p351 = por %p349, %p350
    %s352 = ssub.s32 %s28, %s35
    %p353 = scmp.eq.s32.totalorder %s352, 0
    %s355 = sadd.s32 %s354, 1
    %s356 = scalar_select %p353, %s354, %s355
    %p359 = pneg %p353
    %p360 = scmp.eq.s32.totalorder %s20, 1
    %p361 = por %p359, %p360
    %p362 = scmp.ne.s32.totalorder %s354, %s357
    %p363 = scmp.eq.s32.totalorder %s20, 0
    %p364 = por %p362, %p363
    %p365 = scmp.ne.s32.totalorder %s354, %s357
    %p366 = scmp.eq.s32.totalorder %s25, 1
    %p367 = por %p365, %p366
    %p368 = scmp.ne.s32.totalorder %s357, %s358
    %p369 = scmp.eq.s32.totalorder %s25, 0
    %p370 = por %p368, %p369
    %p371 = scmp.ne.s32.totalorder %s357, %s358
    %p372 = scmp.eq.s32.totalorder %s26, 1
    %p373 = por %p371, %p372
    %p375 = scmp.ne.s32.totalorder %s358, %s374
    %p376 = scmp.eq.s32.totalorder %s26, 0
    %p377 = por %p375, %p376
    %s378 = ssub.s32 %s28, %s35
    %p379 = scmp.eq.s32.totalorder %s378, 0
    %s381 = sadd.s32 %s380, 1
    %s382 = scalar_select %p379, %s380, %s381
    %p385 = pneg %p379
    %p386 = scmp.eq.s32.totalorder %s20, 1
    %p387 = por %p385, %p386
    %p388 = scmp.ne.s32.totalorder %s380, %s383
    %p389 = scmp.eq.s32.totalorder %s20, 0
    %p390 = por %p388, %p389
    %p391 = scmp.ne.s32.totalorder %s380, %s383
    %p392 = scmp.eq.s32.totalorder %s25, 1
    %p393 = por %p391, %p392
    %p394 = scmp.ne.s32.totalorder %s383, %s384
    %p395 = scmp.eq.s32.totalorder %s25, 0
    %p396 = por %p394, %p395
    %p397 = scmp.ne.s32.totalorder %s383, %s384
    %p398 = scmp.eq.s32.totalorder %s26, 1
    %p399 = por %p397, %p398
    %p401 = scmp.ne.s32.totalorder %s384, %s400
    %p402 = scmp.eq.s32.totalorder %s26, 0
    %p403 = por %p401, %p402
    %s404 = ssub.s32 %s27, %s39
    %p405 = scmp.eq.s32.totalorder %s404, 0
    %s407 = sadd.s32 %s406, 1
    %s408 = scalar_select %p405, %s406, %s407
    %p411 = pneg %p405
    %p412 = scmp.eq.s32.totalorder %s20, 1
    %p413 = por %p411, %p412
    %p414 = scmp.ne.s32.totalorder %s406, %s409
    %p415 = scmp.eq.s32.totalorder %s20, 0
    %p416 = por %p414, %p415
    %p417 = scmp.ne.s32.totalorder %s406, %s409
    %p418 = scmp.eq.s32.totalorder %s25, 1
    %p419 = por %p417, %p418
    %p420 = scmp.ne.s32.totalorder %s409, %s410
    %p421 = scmp.eq.s32.totalorder %s25, 0
    %p422 = por %p420, %p421
    %p423 = scmp.ne.s32.totalorder %s409, %s410
    %p424 = scmp.eq.s32.totalorder %s26, 1
    %p425 = por %p423, %p424
    %p427 = scmp.ne.s32.totalorder %s410, %s426
    %p428 = scmp.eq.s32.totalorder %s26, 0
    %p429 = por %p427, %p428
    %p430 = scmp.le.s32.totalorder 1, %s20
    %p431 = scmp.lt.s32.totalorder %s20, 3
    %p432 = pnand %p430, %p431
    %p433 = pneg %p432
    // Predicated region
    $region9: #{hawkes_transformer_forward.1} parent=5 // pred_check
      _
    $region10: #{hawkes_transformer_forward.1} parent=5 // pred_check_branch
      %435 = sbr.rel (%p432) target = $region12
    $region11: #{hawkes_transformer_forward.1} parent=5 // pred_region
      %s436 = ssub.s32 %s20, 1
      // Predicated region
      $region13: #{hawkes_transformer_forward.1} parent=11 // pred_check
        %p437 = pneg %p58
      $region14: #{hawkes_transformer_forward.1} parent=11 // pred_check_branch
        %439 = sbr.rel (%p437) target = $region16
      $region15: #{hawkes_transformer_forward.1} parent=11 // pred_region
        %s440 = smul.u32 2, %s29
        %p441 = scmp.lt.s32.totalorder %s440, 1
        %s442 = scalar_select %p441, %s440, 1
        %s443 = smul.addr %s442, 8
        %s444 = scalar_lea.vmem %s0, %s443
        %s445 = smul.u32 2, %s29
      $region16: #{hawkes_transformer_forward.1} parent=11 // pred_fallthru
        _
      // Predicated region
      $region17: #{hawkes_transformer_forward.1} parent=11 // pred_check
        %p446 = pneg %p84
      $region18: #{hawkes_transformer_forward.1} parent=11 // pred_check_branch
        %448 = sbr.rel (%p446) target = $region20
      $region19: #{hawkes_transformer_forward.1} parent=11 // pred_region
        %s449 = smul.u32 2, %s29
        %p450 = scmp.lt.s32.totalorder %s449, 1
        %s451 = scalar_select %p450, %s449, 1
        %s452 = scalar_lea.vmem %s1, %s451
        %s453 = smul.u32 2, %s29
      $region20: #{hawkes_transformer_forward.1} parent=11 // pred_fallthru
        _
    $region12: #{hawkes_transformer_forward.1} parent=5 // pred_fallthru
      _
    %p454 = scmp.lt.s32.totalorder %s20, 2
    // Predicated region
    $region21: #{hawkes_transformer_forward.1} parent=5 // pred_check
      %p455 = pneg %p454
    $region22: #{hawkes_transformer_forward.1} parent=5 // pred_check_branch
      %457 = sbr.rel (%p455) target = $region24
    $region23: #{hawkes_transformer_forward.1} parent=5 // pred_region
      // Predicated region
      $region25: #{hawkes_transformer_forward.1} parent=23 // pred_check
        %p458 = pneg %p104
      $region26: #{hawkes_transformer_forward.1} parent=23 // pred_check_branch
        %460 = sbr.rel (%p458) target = $region28
      $region27: #{hawkes_transformer_forward.1} parent=23 // pred_region
        %p461 = scmp.lt.s32.totalorder %s28, 1
        %s462 = scalar_select %p461, %s28, 1
        %s463 = smul.addr %s462, 4
        %s464 = smul.addr %s463, 4
        %s465 = scalar_lea.vmem %s2, %s464
      $region28: #{hawkes_transformer_forward.1} parent=23 // pred_fallthru
        _
      // Predicated region
      $region29: #{hawkes_transformer_forward.1} parent=23 // pred_check
        %p466 = pneg %p130
      $region30: #{hawkes_transformer_forward.1} parent=23 // pred_check_branch
        %468 = sbr.rel (%p466) target = $region32
      $region31: #{hawkes_transformer_forward.1} parent=23 // pred_region
        %p469 = scmp.lt.s32.totalorder %s28, 1
        %s470 = scalar_select %p469, %s28, 1
        %s471 = scalar_lea.vmem %s3, %s470
      $region32: #{hawkes_transformer_forward.1} parent=23 // pred_fallthru
        _
      // Predicated region
      $region33: #{hawkes_transformer_forward.1} parent=23 // pred_check
        %p472 = pneg %p156
      $region34: #{hawkes_transformer_forward.1} parent=23 // pred_check_branch
        %474 = sbr.rel (%p472) target = $region36
      $region35: #{hawkes_transformer_forward.1} parent=23 // pred_region
        %p475 = scmp.lt.s32.totalorder %s28, 1
        %s476 = scalar_select %p475, %s28, 1
        %s477 = smul.addr %s476, 4
        %s478 = smul.addr %s477, 4
        %s479 = scalar_lea.vmem %s4, %s478
      $region36: #{hawkes_transformer_forward.1} parent=23 // pred_fallthru
        _
      // Predicated region
      $region37: #{hawkes_transformer_forward.1} parent=23 // pred_check
        %p480 = pneg %p182
      $region38: #{hawkes_transformer_forward.1} parent=23 // pred_check_branch
        %482 = sbr.rel (%p480) target = $region40
      $region39: #{hawkes_transformer_forward.1} parent=23 // pred_region
        %p483 = scmp.lt.s32.totalorder %s28, 1
        %s484 = scalar_select %p483, %s28, 1
        %s485 = scalar_lea.vmem %s5, %s484
      $region40: #{hawkes_transformer_forward.1} parent=23 // pred_fallthru
        _
      // Predicated region
      $region41: #{hawkes_transformer_forward.1} parent=23 // pred_check
        %p486 = pneg %p208
      $region42: #{hawkes_transformer_forward.1} parent=23 // pred_check_branch
        %488 = sbr.rel (%p486) target = $region44
      $region43: #{hawkes_transformer_forward.1} parent=23 // pred_region
        %p489 = scmp.lt.s32.totalorder %s28, 1
        %s490 = scalar_select %p489, %s28, 1
        %s491 = scalar_lea.vmem %s6, %s490
      $region44: #{hawkes_transformer_forward.1} parent=23 // pred_fallthru
        _
      // Predicated region
      $region45: #{hawkes_transformer_forward.1} parent=23 // pred_check
        %p492 = pneg %p234
      $region46: #{hawkes_transformer_forward.1} parent=23 // pred_check_branch
        %494 = sbr.rel (%p492) target = $region48
      $region47: #{hawkes_transformer_forward.1} parent=23 // pred_region
        %p495 = scmp.lt.s32.totalorder %s28, 1
        %s496 = scalar_select %p495, %s28, 1
        %s497 = scalar_lea.vmem %s7, %s496
      $region48: #{hawkes_transformer_forward.1} parent=23 // pred_fallthru
        _
      // Predicated region
      $region49: #{hawkes_transformer_forward.1} parent=23 // pred_check
        %p498 = pneg %p260
      $region50: #{hawkes_transformer_forward.1} parent=23 // pred_check_branch
        %500 = sbr.rel (%p498) target = $region52
      $region51: #{hawkes_transformer_forward.1} parent=23 // pred_region
        %p501 = scmp.lt.s32.totalorder %s28, 1
        %s502 = scalar_select %p501, %s28, 1
        %s503 = smul.addr %s502, 4
        %s504 = smul.addr %s503, 4
        %s505 = scalar_lea.vmem %s8, %s504
      $region52: #{hawkes_transformer_forward.1} parent=23 // pred_fallthru
        _
      // Predicated region
      $region53: #{hawkes_transformer_forward.1} parent=23 // pred_check
        %p506 = pneg %p286
      $region54: #{hawkes_transformer_forward.1} parent=23 // pred_check_branch
        %508 = sbr.rel (%p506) target = $region56
      $region55: #{hawkes_transformer_forward.1} parent=23 // pred_region
        %p509 = scmp.lt.s32.totalorder %s28, 1
        %s510 = scalar_select %p509, %s28, 1
        %s511 = scalar_lea.vmem %s9, %s510
      $region56: #{hawkes_transformer_forward.1} parent=23 // pred_fallthru
        _
      // Predicated region
      $region57: #{hawkes_transformer_forward.1} parent=23 // pred_check
        %p512 = pneg %p312
      $region58: #{hawkes_transformer_forward.1} parent=23 // pred_check_branch
        %514 = sbr.rel (%p512) target = $region60
      $region59: #{hawkes_transformer_forward.1} parent=23 // pred_region
        %p515 = scmp.lt.s32.totalorder %s28, 1
        %s516 = scalar_select %p515, %s28, 1
        %s517 = smul.addr %s516, 8
        %s518 = smul.addr %s517, 4
        %s519 = scalar_lea.vmem %s10, %s518
      $region60: #{hawkes_transformer_forward.1} parent=23 // pred_fallthru
        _
      // Predicated region
      $region61: #{hawkes_transformer_forward.1} parent=23 // pred_check
        %p520 = pneg %p338
      $region62: #{hawkes_transformer_forward.1} parent=23 // pred_check_branch
        %522 = sbr.rel (%p520) target = $region64
      $region63: #{hawkes_transformer_forward.1} parent=23 // pred_region
        %p523 = scmp.lt.s32.totalorder %s28, 1
        %s524 = scalar_select %p523, %s28, 1
        %s525 = scalar_lea.vmem %s11, %s524
      $region64: #{hawkes_transformer_forward.1} parent=23 // pred_fallthru
        _
      // Predicated region
      $region65: #{hawkes_transformer_forward.1} parent=23 // pred_check
        %p526 = pneg %p364
      $region66: #{hawkes_transformer_forward.1} parent=23 // pred_check_branch
        %528 = sbr.rel (%p526) target = $region68
      $region67: #{hawkes_transformer_forward.1} parent=23 // pred_region
        %p529 = scmp.lt.s32.totalorder %s28, 1
        %s530 = scalar_select %p529, %s28, 1
        %s531 = scalar_lea.vmem %s12, %s530
      $region68: #{hawkes_transformer_forward.1} parent=23 // pred_fallthru
        _
      // Predicated region
      $region69: #{hawkes_transformer_forward.1} parent=23 // pred_check
        %p532 = pneg %p390
      $region70: #{hawkes_transformer_forward.1} parent=23 // pred_check_branch
        %534 = sbr.rel (%p532) target = $region72
      $region71: #{hawkes_transformer_forward.1} parent=23 // pred_region
        %p535 = scmp.lt.s32.totalorder %s28, 1
        %s536 = scalar_select %p535, %s28, 1
        %s537 = scalar_lea.vmem %s13, %s536
      $region72: #{hawkes_transformer_forward.1} parent=23 // pred_fallthru
        _
    $region24: #{hawkes_transformer_forward.1} parent=5 // pred_fallthru
      _
    %p538 = scmp.le.s32.totalorder 1, %s20
    %p539 = scmp.lt.s32.totalorder %s20, 3
    %p540 = pnand %p538, %p539
    %p541 = pneg %p540
    // Predicated region
    $region73: #{hawkes_transformer_forward.1} parent=5 // pred_check
      _
    $region74: #{hawkes_transformer_forward.1} parent=5 // pred_check_branch
      %543 = sbr.rel (%p540) target = $region76
    $region75: #{hawkes_transformer_forward.1} parent=5 // pred_region
      %s544 = ssub.s32 %s20, 1
      %s545 = smul.u32 2, %s29
      %p546 = scmp.lt.s32.totalorder %s545, 1
      %s547 = scalar_select %p546, %s545, 1
      %s548 = smul.addr %s547, 8
      %s549 = scalar_lea.vmem %s0, %s548
      %p550 = pneg %p58
      %p551 = pneg %p55
      %s552 = smul.u32 2, %s29
      %p553 = scmp.lt.s32.totalorder %s552, 1
      %s554 = scalar_select %p553, %s552, 1
      %s555 = scalar_lea.vmem %s1, %s554
      %p556 = pneg %p84
      %p557 = pneg %p81
      %p558 = scmp.lt.s32.totalorder %s30, 1
      %s559 = scalar_select %p558, %s30, 1
      %s560 = smul.addr %s559, 4
      %s561 = smul.addr %s560, 4
      %s562 = scalar_lea.vmem %s2, %s561
      %p563 = pneg %p110
      %p564 = pneg %p107
      %p565 = scmp.lt.s32.totalorder %s30, 1
      %s566 = scalar_select %p565, %s30, 1
      %s567 = scalar_lea.vmem %s3, %s566
      %p568 = pneg %p136
      %p569 = pneg %p133
      %p570 = scmp.lt.s32.totalorder %s30, 1
      %s571 = scalar_select %p570, %s30, 1
      %s572 = smul.addr %s571, 4
      %s573 = smul.addr %s572, 4
      %s574 = scalar_lea.vmem %s4, %s573
      %p575 = pneg %p162
      %p576 = pneg %p159
      %p577 = scmp.lt.s32.totalorder %s30, 1
      %s578 = scalar_select %p577, %s30, 1
      %s579 = scalar_lea.vmem %s5, %s578
      %p580 = pneg %p188
      %p581 = pneg %p185
      %p582 = scmp.lt.s32.totalorder %s30, 1
      %s583 = scalar_select %p582, %s30, 1
      %s584 = scalar_lea.vmem %s6, %s583
      %p585 = pneg %p214
      %p586 = pneg %p211
      %p587 = scmp.lt.s32.totalorder %s30, 1
      %s588 = scalar_select %p587, %s30, 1
      %s589 = scalar_lea.vmem %s7, %s588
      %p590 = pneg %p240
      %p591 = pneg %p237
      %p592 = scmp.lt.s32.totalorder %s30, 1
      %s593 = scalar_select %p592, %s30, 1
      %s594 = smul.addr %s593, 4
      %s595 = smul.addr %s594, 4
      %s596 = scalar_lea.vmem %s8, %s595
      %p597 = pneg %p266
      %p598 = pneg %p263
      %p599 = scmp.lt.s32.totalorder %s30, 1
      %s600 = scalar_select %p599, %s30, 1
      %s601 = scalar_lea.vmem %s9, %s600
      %p602 = pneg %p292
      %p603 = pneg %p289
      %p604 = scmp.lt.s32.totalorder %s30, 1
      %s605 = scalar_select %p604, %s30, 1
      %s606 = smul.addr %s605, 8
      %s607 = smul.addr %s606, 4
      %s608 = scalar_lea.vmem %s10, %s607
      %p609 = pneg %p318
      %p610 = pneg %p315
      %p611 = scmp.lt.s32.totalorder %s30, 1
      %s612 = scalar_select %p611, %s30, 1
      %s613 = scalar_lea.vmem %s11, %s612
      %p614 = pneg %p344
      %p615 = pneg %p341
      %p616 = scmp.lt.s32.totalorder %s30, 1
      %s617 = scalar_select %p616, %s30, 1
      %s618 = scalar_lea.vmem %s12, %s617
      %p619 = pneg %p370
      %p620 = pneg %p367
      %p621 = scmp.lt.s32.totalorder %s30, 1
      %s622 = scalar_select %p621, %s30, 1
      %s623 = scalar_lea.vmem %s13, %s622
      %p624 = pneg %p396
      %p625 = pneg %p393
      %p626 = pneg %p422
      %p627 = pneg %p419
      %s628 = smul.u32 2, %s29
      %p629 = scmp.lt.s32.totalorder %s628, 1
      %s630 = scalar_select %p629, %s628, 1
      %s631 = smul.addr %s630, 8
      %s632 = scalar_lea.vmem %s14, %s631
      %s633 = smul.u32 2, %s29
      %p634 = scmp.lt.s32.totalorder %s633, 1
      %s635 = scalar_select %p634, %s633, 1
      %s636 = smul.addr %s635, 8
      %s637 = scalar_lea.vmem %s0, %s636
      %s638 = smul.u32 2, %s29
      %s639 = smul.u32 2, %s29
      %p640 = scmp.lt.s32.totalorder %s639, 1
      %s641 = scalar_select %p640, %s639, 1
      %s642 = scalar_lea.vmem %s1, %s641
      %s643 = smul.u32 2, %s29
      %p644 = scmp.lt.s32.totalorder %s30, 1
      %s645 = scalar_select %p644, %s30, 1
      %s646 = smul.addr %s645, 4
      %s647 = smul.addr %s646, 4
      %s648 = scalar_lea.vmem %s2, %s647
      %p649 = scmp.lt.s32.totalorder %s30, 1
      %s650 = scalar_select %p649, %s30, 1
      %s651 = scalar_lea.vmem %s3, %s650
      %p652 = scmp.lt.s32.totalorder %s30, 1
      %s653 = scalar_select %p652, %s30, 1
      %s654 = smul.addr %s653, 4
      %s655 = smul.addr %s654, 4
      %s656 = scalar_lea.vmem %s4, %s655
      %p657 = scmp.lt.s32.totalorder %s30, 1
      %s658 = scalar_select %p657, %s30, 1
      %s659 = scalar_lea.vmem %s5, %s658
      %p660 = scmp.lt.s32.totalorder %s30, 1
      %s661 = scalar_select %p660, %s30, 1
      %s662 = scalar_lea.vmem %s6, %s661
      %p663 = scmp.lt.s32.totalorder %s30, 1
      %s664 = scalar_select %p663, %s30, 1
      %s665 = scalar_lea.vmem %s7, %s664
      %p666 = scmp.lt.s32.totalorder %s30, 1
      %s667 = scalar_select %p666, %s30, 1
      %s668 = smul.addr %s667, 4
      %s669 = smul.addr %s668, 4
      %s670 = scalar_lea.vmem %s8, %s669
      %p671 = scmp.lt.s32.totalorder %s30, 1
      %s672 = scalar_select %p671, %s30, 1
      %s673 = scalar_lea.vmem %s9, %s672
      %p674 = scmp.lt.s32.totalorder %s30, 1
      %s675 = scalar_select %p674, %s30, 1
      %s676 = smul.addr %s675, 8
      %s677 = smul.addr %s676, 4
      %s678 = scalar_lea.vmem %s10, %s677
      %p679 = scmp.lt.s32.totalorder %s30, 1
      %s680 = scalar_select %p679, %s30, 1
      %s681 = scalar_lea.vmem %s11, %s680
      %p682 = scmp.lt.s32.totalorder %s30, 1
      %s683 = scalar_select %p682, %s30, 1
      %s684 = scalar_lea.vmem %s12, %s683
      %p685 = scmp.lt.s32.totalorder %s30, 1
      %s686 = scalar_select %p685, %s30, 1
      %s687 = scalar_lea.vmem %s13, %s686
      %s688 = smul.u32 2, %s29
      %p689 = scmp.lt.s32.totalorder %s688, 1
      %s690 = scalar_select %p689, %s688, 1
      %s691 = smul.addr %s690, 8
      %s692 = scalar_lea.vmem %s14, %s691
      %s693 = smul.u32 2, %s29
      %p695 = scmp.eq.s32.totalorder %s30, 0
      // Predicated region
      $region77: #{hawkes_transformer_forward.1} parent=75 // pred_check
        %p696 = pneg %p695
      $region78: #{hawkes_transformer_forward.1} parent=75 // pred_check_branch
        %698 = sbr.rel (%p696) target = $region80
      $region79: #{hawkes_transformer_forward.1} parent=75 // pred_region
        %v699 = vld [vmem:[%s637] sm:$0xff]
        %v700 = vld [vmem:[%s637 + $0x8] sm:$0xff]
        %vm701 = vcmask 261120
        %702 = vst.msk [vmem:[%s692] sm:$0xff] %vm701, %v699
        %703 = vst.msk [vmem:[%s692 + $0x8] sm:$0xff] %vm701, %v700
      $region80: #{hawkes_transformer_forward.1} parent=75 // pred_fallthru
        _
      %v704 = vld [vmem:[%s692] sm:$0xff]
      %v705 = vld [vmem:[%s692 + $0x8] sm:$0xff]
      %v706 = vpack.c.bf16 %v705, %v704
      %v707 = vld [vmem:[%s648] sm:$0xf]
      %v708 = vld [vmem:[%s648 + $0x4] sm:$0xf]
      %v709 = vld [vmem:[%s648 + $0x8] sm:$0xf]
      %v710 = vld [vmem:[%s648 + $0xc] sm:$0xf]
      %v711 = vld [vmem:[%s651] sm:$0x1]
      %v713 = vlaneseq
      %v714 = vshrl.u32 %v713, 7
      %v715 = vsub.s32 0, %v714
      %v716 = vrot.slane %v711, %v715
      %v722 = vunpack.c.l.b16 %v707
      %v723 = vunpack.c.l.b16 %v708
      %v724 = vunpack.c.l.b16 %v709
      %v725 = vunpack.c.l.b16 %v710
      %v726 = vpack.c.b16 %v723, %v722
      %v727 = vpack.c.b16 %v725, %v724
      %vm730 = vcmask 261120
      %v732 = vsel %vm730, %v706, 0
      %734 = vmatprep.subr.bf16.mxu0 0
      %735 = vmatpush1.bf16.msra.mxu0 0
      %736 = vmatprep.subr.bf16.mxu0 0
      %737 = vmatpush1.bf16.msra.mxu0 0
      %738 = vmatprep.subr.bf16.mxu0 0
      %739 = vmatpush1.bf16.msra.mxu0 0
      %740 = vmatprep.subr.bf16.mxu0 0
      %741 = vmatpush1.bf16.msra.mxu0 0
      %742 = vmatprep.subr.bf16.mxu0 0
      %743 = vmatpush1.bf16.msra.mxu0 0
      %744 = vmatprep.subr.bf16.mxu0 0
      %745 = vmatpush1.bf16.msra.mxu0 0
      %746 = vmatprep.subr.bf16.mxu0 0
      %747 = vmatpush1.bf16.msra.mxu0 %v727
      %748 = vmatprep.subr.bf16.mxu0 0
      %749 = vmatpush1.bf16.msra.mxu0 %v726
      %750 = vmatprep.subr.bf16.mxu0 0
      %751 = vmatpush2.bf16.msra.mxu0 0
      %752 = vmatprep.subr.bf16.mxu0 0
      %753 = vmatpush2.bf16.msra.mxu0 0
      %754 = vmatprep.subr.bf16.mxu0 0
      %755 = vmatpush2.bf16.msra.mxu0 0
      %756 = vmatprep.subr.bf16.mxu0 0
      %757 = vmatpush2.bf16.msra.mxu0 0
      %758 = vmatprep.subr.bf16.mxu0 0
      %759 = vmatpush2.bf16.msra.mxu0 0
      %760 = vmatprep.subr.bf16.mxu0 0
      %761 = vmatpush2.bf16.msra.mxu0 0
      %762 = vmatprep.subr.bf16.mxu0 0
      %763 = vmatpush2.bf16.msra.mxu0 0
      %764 = vmatprep.subr.bf16.mxu0 0
      %765 = vmatpush2.bf16.msra.mxu0 0
      %766 = vmatprep.mubr.bf16.mxu0 0
      %767 = vmatmul.mubr.bf16.gmra.mxu0 %v732
      %v768 = vpop.f32.mrf.mxu0
      %v769 = vadd.f32 %v716, %v768
      %v770 = vpop.f32.mrf.mxu0
      %v771 = vpop.f32.mrf.mxu0
      %v772 = vadd.f32 %v716, %v771
      %v773 = vpop.f32.mrf.mxu0
      %774 = vdwg.mxu0
      %776 = vrot.lane.b32.xlu0 %v769, 120
      %v777 = vpop.permute.xlu0 %776
      %779 = vrot.lane.b32.xlu0 %v769, 112
      %v780 = vpop.permute.xlu0 %779
      %782 = vrot.lane.b32.xlu0 %v769, 104
      %v783 = vpop.permute.xlu0 %782
      %786 = vrot.lane.b32.xlu0 %v772, 120
      %v787 = vpop.permute.xlu0 %786
      %789 = vrot.lane.b32.xlu0 %v772, 112
      %v790 = vpop.permute.xlu0 %789
      %792 = vrot.lane.b32.xlu0 %v772, 104
      %v793 = vpop.permute.xlu0 %792
      %v795 = vlaneseq
      %v796 = vshrl.u32 %v795, 7
      %v797 = vlaneseq
      %v798 = vand.u32 %v797, 127
      %vm799 = vcmp.gt.s32.totalorder %v798, %v796
      %v800 = vsel %vm799, -1e+30, 0.0
      %v801 = vld [vmem:[%s642] sm:$0x1]
      %v802 = vld [vmem:[%s642 + $0x1] sm:$0x1]
      %v803 = vmul.f32 %v769, 0.35355338
      %v804 = vmul.f32 %v777, 0.35355338
      %v805 = vmul.f32 %v780, 0.35355338
      %v806 = vmul.f32 %v783, 0.35355338
      %v807 = vmul.f32 %v772, 0.35355338
      %v808 = vmul.f32 %v787, 0.35355338
      %v809 = vmul.f32 %v790, 0.35355338
      %v810 = vmul.f32 %v793, 0.35355338
      %v811 = vpack.c.bf16 %v803, %v803
      %v812 = vpack.c.bf16 %v804, %v804
      %v813 = vpack.c.bf16 %v805, %v805
      %v814 = vpack.c.bf16 %v806, %v806
      %v815 = vpack.c.bf16 %v807, %v807
      %v816 = vpack.c.bf16 %v808, %v808
      %v817 = vpack.c.bf16 %v809, %v809
      %v818 = vpack.c.bf16 %v810, %v810
      %v819 = vpack.c.bf16 %v769, %v769
      %v820 = vpack.c.bf16 %v777, %v777
      %v821 = vpack.c.bf16 %v780, %v780
      %v822 = vpack.c.bf16 %v783, %v783
      %v823 = vpack.c.bf16 %v772, %v772
      %v824 = vpack.c.bf16 %v787, %v787
      %v825 = vpack.c.bf16 %v790, %v790
      %v826 = vpack.c.bf16 %v793, %v793
      %828 = vrot.lane.b32.xlu0 %v819, 96
      %v829 = vpop.permute.xlu0 %828
      %vm830 = vcmask 64512
      %v832 = vsel %vm830, %v811, 0
      %v835 = vsel %vm830, %v829, 0
      %837 = vmatprep.subr.bf16.mxu0 0
      %838 = vmatpush1.bf16.xpose.msra.mxu0 0
      %839 = vmatprep.subr.bf16.mxu0 0
      %840 = vmatpush1.bf16.xpose.msra.mxu0 0
      %841 = vmatprep.subr.bf16.mxu0 0
      %842 = vmatpush1.bf16.xpose.msra.mxu0 0
      %843 = vmatprep.subr.bf16.mxu0 0
      %844 = vmatpush1.bf16.xpose.msra.mxu0 0
      %845 = vmatprep.subr.bf16.mxu0 0
      %846 = vmatpush1.bf16.xpose.msra.mxu0 0
      %847 = vmatprep.subr.bf16.mxu0 0
      %848 = vmatpush1.bf16.xpose.msra.mxu0 0
      %849 = vmatprep.subr.bf16.mxu0 0
      %850 = vmatpush1.bf16.xpose.msra.mxu0 0
      %851 = vmatprep.subr.bf16.mxu0 0
      %852 = vmatpush1.bf16.xpose.msra.mxu0 %v835
      %853 = vmatprep.subr.bf16.mxu0 0
      %854 = vmatpush2.bf16.xpose.msra.mxu0 0
      %855 = vmatprep.subr.bf16.mxu0 0
      %856 = vmatpush2.bf16.xpose.msra.mxu0 0
      %857 = vmatprep.subr.bf16.mxu0 0
      %858 = vmatpush2.bf16.xpose.msra.mxu0 0
      %859 = vmatprep.subr.bf16.mxu0 0
      %860 = vmatpush2.bf16.xpose.msra.mxu0 0
      %861 = vmatprep.subr.bf16.mxu0 0
      %862 = vmatpush2.bf16.xpose.msra.mxu0 0
      %863 = vmatprep.subr.bf16.mxu0 0
      %864 = vmatpush2.bf16.xpose.msra.mxu0 0
      %865 = vmatprep.subr.bf16.mxu0 0
      %866 = vmatpush2.bf16.xpose.msra.mxu0 0
      %867 = vmatprep.subr.bf16.mxu0 0
      %868 = vmatpush2.bf16.xpose.msra.mxu0 0
      %869 = vmatprep.mubr.bf16.mxu0 0
      %870 = vmatmul.mubr.bf16.gmra.mxu0 %v832
      %v871 = vpop.f32.mrf.mxu0
      %v872 = vadd.f32 0.0, %v871
      %v873 = vpop.f32.mrf.mxu0
      %v874 = vpop.f32.mrf.mxu0
      %v875 = vpop.f32.mrf.mxu0
      %876 = vdwg.mxu0
      %878 = vrot.lane.b32.xlu0 %v820, 96
      %v879 = vpop.permute.xlu0 %878
      %v881 = vsel %vm830, %v812, 0
      %v884 = vsel %vm830, %v879, 0
      %886 = vmatprep.subr.bf16.mxu0 0
      %887 = vmatpush1.bf16.xpose.msra.mxu0 0
      %888 = vmatprep.subr.bf16.mxu0 0
      %889 = vmatpush1.bf16.xpose.msra.mxu0 0
      %890 = vmatprep.subr.bf16.mxu0 0
      %891 = vmatpush1.bf16.xpose.msra.mxu0 0
      %892 = vmatprep.subr.bf16.mxu0 0
      %893 = vmatpush1.bf16.xpose.msra.mxu0 0
      %894 = vmatprep.subr.bf16.mxu0 0
      %895 = vmatpush1.bf16.xpose.msra.mxu0 0
      %896 = vmatprep.subr.bf16.mxu0 0
      %897 = vmatpush1.bf16.xpose.msra.mxu0 0
      %898 = vmatprep.subr.bf16.mxu0 0
      %899 = vmatpush1.bf16.xpose.msra.mxu0 0
      %900 = vmatprep.subr.bf16.mxu0 0
      %901 = vmatpush1.bf16.xpose.msra.mxu0 %v884
      %902 = vmatprep.subr.bf16.mxu0 0
      %903 = vmatpush2.bf16.xpose.msra.mxu0 0
      %904 = vmatprep.subr.bf16.mxu0 0
      %905 = vmatpush2.bf16.xpose.msra.mxu0 0
      %906 = vmatprep.subr.bf16.mxu0 0
      %907 = vmatpush2.bf16.xpose.msra.mxu0 0
      %908 = vmatprep.subr.bf16.mxu0 0
      %909 = vmatpush2.bf16.xpose.msra.mxu0 0
      %910 = vmatprep.subr.bf16.mxu0 0
      %911 = vmatpush2.bf16.xpose.msra.mxu0 0
      %912 = vmatprep.subr.bf16.mxu0 0
      %913 = vmatpush2.bf16.xpose.msra.mxu0 0
      %914 = vmatprep.subr.bf16.mxu0 0
      %915 = vmatpush2.bf16.xpose.msra.mxu0 0
      %916 = vmatprep.subr.bf16.mxu0 0
      %917 = vmatpush2.bf16.xpose.msra.mxu0 0
      %918 = vmatprep.mubr.bf16.mxu0 0
      %919 = vmatmul.mubr.bf16.gmra.mxu0 %v881
      %v920 = vpop.f32.mrf.mxu0
      %v921 = vadd.f32 0.0, %v920
      %v922 = vpop.f32.mrf.mxu0
      %v923 = vpop.f32.mrf.mxu0
      %v924 = vpop.f32.mrf.mxu0
      %925 = vdwg.mxu0
      %927 = vrot.lane.b32.xlu0 %v821, 96
      %v928 = vpop.permute.xlu0 %927
      %v930 = vsel %vm830, %v813, 0
      %v933 = vsel %vm830, %v928, 0
      %935 = vmatprep.subr.bf16.mxu0 0
      %936 = vmatpush1.bf16.xpose.msra.mxu0 0
      %937 = vmatprep.subr.bf16.mxu0 0
      %938 = vmatpush1.bf16.xpose.msra.mxu0 0
      %939 = vmatprep.subr.bf16.mxu0 0
      %940 = vmatpush1.bf16.xpose.msra.mxu0 0
      %941 = vmatprep.subr.bf16.mxu0 0
      %942 = vmatpush1.bf16.xpose.msra.mxu0 0
      %943 = vmatprep.subr.bf16.mxu0 0
      %944 = vmatpush1.bf16.xpose.msra.mxu0 0
      %945 = vmatprep.subr.bf16.mxu0 0
      %946 = vmatpush1.bf16.xpose.msra.mxu0 0
      %947 = vmatprep.subr.bf16.mxu0 0
      %948 = vmatpush1.bf16.xpose.msra.mxu0 0
      %949 = vmatprep.subr.bf16.mxu0 0
      %950 = vmatpush1.bf16.xpose.msra.mxu0 %v933
      %951 = vmatprep.subr.bf16.mxu0 0
      %952 = vmatpush2.bf16.xpose.msra.mxu0 0
      %953 = vmatprep.subr.bf16.mxu0 0
      %954 = vmatpush2.bf16.xpose.msra.mxu0 0
      %955 = vmatprep.subr.bf16.mxu0 0
      %956 = vmatpush2.bf16.xpose.msra.mxu0 0
      %957 = vmatprep.subr.bf16.mxu0 0
      %958 = vmatpush2.bf16.xpose.msra.mxu0 0
      %959 = vmatprep.subr.bf16.mxu0 0
      %960 = vmatpush2.bf16.xpose.msra.mxu0 0
      %961 = vmatprep.subr.bf16.mxu0 0
      %962 = vmatpush2.bf16.xpose.msra.mxu0 0
      %963 = vmatprep.subr.bf16.mxu0 0
      %964 = vmatpush2.bf16.xpose.msra.mxu0 0
      %965 = vmatprep.subr.bf16.mxu0 0
      %966 = vmatpush2.bf16.xpose.msra.mxu0 0
      %967 = vmatprep.mubr.bf16.mxu0 0
      %968 = vmatmul.mubr.bf16.gmra.mxu0 %v930
      %v969 = vpop.f32.mrf.mxu0
      %v970 = vadd.f32 0.0, %v969
      %v971 = vpop.f32.mrf.mxu0
      %v972 = vpop.f32.mrf.mxu0
      %v973 = vpop.f32.mrf.mxu0
      %974 = vdwg.mxu0
      %976 = vrot.lane.b32.xlu0 %v822, 96
      %v977 = vpop.permute.xlu0 %976
      %v979 = vsel %vm830, %v814, 0
      %v982 = vsel %vm830, %v977, 0
      %984 = vmatprep.subr.bf16.mxu0 0
      %985 = vmatpush1.bf16.xpose.msra.mxu0 0
      %986 = vmatprep.subr.bf16.mxu0 0
      %987 = vmatpush1.bf16.xpose.msra.mxu0 0
      %988 = vmatprep.subr.bf16.mxu0 0
      %989 = vmatpush1.bf16.xpose.msra.mxu0 0
      %990 = vmatprep.subr.bf16.mxu0 0
      %991 = vmatpush1.bf16.xpose.msra.mxu0 0
      %992 = vmatprep.subr.bf16.mxu0 0
      %993 = vmatpush1.bf16.xpose.msra.mxu0 0
      %994 = vmatprep.subr.bf16.mxu0 0
      %995 = vmatpush1.bf16.xpose.msra.mxu0 0
      %996 = vmatprep.subr.bf16.mxu0 0
      %997 = vmatpush1.bf16.xpose.msra.mxu0 0
      %998 = vmatprep.subr.bf16.mxu0 0
      %999 = vmatpush1.bf16.xpose.msra.mxu0 %v982
      %1000 = vmatprep.subr.bf16.mxu0 0
      %1001 = vmatpush2.bf16.xpose.msra.mxu0 0
      %1002 = vmatprep.subr.bf16.mxu0 0
      %1003 = vmatpush2.bf16.xpose.msra.mxu0 0
      %1004 = vmatprep.subr.bf16.mxu0 0
      %1005 = vmatpush2.bf16.xpose.msra.mxu0 0
      %1006 = vmatprep.subr.bf16.mxu0 0
      %1007 = vmatpush2.bf16.xpose.msra.mxu0 0
      %1008 = vmatprep.subr.bf16.mxu0 0
      %1009 = vmatpush2.bf16.xpose.msra.mxu0 0
      %1010 = vmatprep.subr.bf16.mxu0 0
      %1011 = vmatpush2.bf16.xpose.msra.mxu0 0
      %1012 = vmatprep.subr.bf16.mxu0 0
      %1013 = vmatpush2.bf16.xpose.msra.mxu0 0
      %1014 = vmatprep.subr.bf16.mxu0 0
      %1015 = vmatpush2.bf16.xpose.msra.mxu0 0
      %1016 = vmatprep.mubr.bf16.mxu0 0
      %1017 = vmatmul.mubr.bf16.gmra.mxu0 %v979
      %v1018 = vpop.f32.mrf.mxu0
      %v1019 = vadd.f32 0.0, %v1018
      %v1020 = vpop.f32.mrf.mxu0
      %v1021 = vpop.f32.mrf.mxu0
      %v1022 = vpop.f32.mrf.mxu0
      %1023 = vdwg.mxu0
      %1025 = vrot.lane.b32.xlu0 %v823, 96
      %v1026 = vpop.permute.xlu0 %1025
      %v1028 = vsel %vm830, %v815, 0
      %v1031 = vsel %vm830, %v1026, 0
      %1033 = vmatprep.subr.bf16.mxu0 0
      %1034 = vmatpush1.bf16.xpose.msra.mxu0 0
      %1035 = vmatprep.subr.bf16.mxu0 0
      %1036 = vmatpush1.bf16.xpose.msra.mxu0 0
      %1037 = vmatprep.subr.bf16.mxu0 0
      %1038 = vmatpush1.bf16.xpose.msra.mxu0 0
      %1039 = vmatprep.subr.bf16.mxu0 0
      %1040 = vmatpush1.bf16.xpose.msra.mxu0 0
      %1041 = vmatprep.subr.bf16.mxu0 0
      %1042 = vmatpush1.bf16.xpose.msra.mxu0 0
      %1043 = vmatprep.subr.bf16.mxu0 0
      %1044 = vmatpush1.bf16.xpose.msra.mxu0 0
      %1045 = vmatprep.subr.bf16.mxu0 0
      %1046 = vmatpush1.bf16.xpose.msra.mxu0 0
      %1047 = vmatprep.subr.bf16.mxu0 0
      %1048 = vmatpush1.bf16.xpose.msra.mxu0 %v1031
      %1049 = vmatprep.subr.bf16.mxu0 0
      %1050 = vmatpush2.bf16.xpose.msra.mxu0 0
      %1051 = vmatprep.subr.bf16.mxu0 0
      %1052 = vmatpush2.bf16.xpose.msra.mxu0 0
      %1053 = vmatprep.subr.bf16.mxu0 0
      %1054 = vmatpush2.bf16.xpose.msra.mxu0 0
      %1055 = vmatprep.subr.bf16.mxu0 0
      %1056 = vmatpush2.bf16.xpose.msra.mxu0 0
      %1057 = vmatprep.subr.bf16.mxu0 0
      %1058 = vmatpush2.bf16.xpose.msra.mxu0 0
      %1059 = vmatprep.subr.bf16.mxu0 0
      %1060 = vmatpush2.bf16.xpose.msra.mxu0 0
      %1061 = vmatprep.subr.bf16.mxu0 0
      %1062 = vmatpush2.bf16.xpose.msra.mxu0 0
      %1063 = vmatprep.subr.bf16.mxu0 0
      %1064 = vmatpush2.bf16.xpose.msra.mxu0 0
      %1065 = vmatprep.mubr.bf16.mxu0 0
      %1066 = vmatmul.mubr.bf16.gmra.mxu0 %v1028
      %v1067 = vpop.f32.mrf.mxu0
      %v1068 = vadd.f32 0.0, %v1067
      %v1069 = vpop.f32.mrf.mxu0
      %v1070 = vpop.f32.mrf.mxu0
      %v1071 = vpop.f32.mrf.mxu0
      %1072 = vdwg.mxu0
      %1074 = vrot.lane.b32.xlu0 %v824, 96
      %v1075 = vpop.permute.xlu0 %1074
      %v1077 = vsel %vm830, %v816, 0
      %v1080 = vsel %vm830, %v1075, 0
      %1082 = vmatprep.subr.bf16.mxu0 0
      %1083 = vmatpush1.bf16.xpose.msra.mxu0 0
      %1084 = vmatprep.subr.bf16.mxu0 0
      %1085 = vmatpush1.bf16.xpose.msra.mxu0 0
      %1086 = vmatprep.subr.bf16.mxu0 0
      %1087 = vmatpush1.bf16.xpose.msra.mxu0 0
      %1088 = vmatprep.subr.bf16.mxu0 0
      %1089 = vmatpush1.bf16.xpose.msra.mxu0 0
      %1090 = vmatprep.subr.bf16.mxu0 0
      %1091 = vmatpush1.bf16.xpose.msra.mxu0 0
      %1092 = vmatprep.subr.bf16.mxu0 0
      %1093 = vmatpush1.bf16.xpose.msra.mxu0 0
      %1094 = vmatprep.subr.bf16.mxu0 0
      %1095 = vmatpush1.bf16.xpose.msra.mxu0 0
      %1096 = vmatprep.subr.bf16.mxu0 0
      %1097 = vmatpush1.bf16.xpose.msra.mxu0 %v1080
      %1098 = vmatprep.subr.bf16.mxu0 0
      %1099 = vmatpush2.bf16.xpose.msra.mxu0 0
      %1100 = vmatprep.subr.bf16.mxu0 0
      %1101 = vmatpush2.bf16.xpose.msra.mxu0 0
      %1102 = vmatprep.subr.bf16.mxu0 0
      %1103 = vmatpush2.bf16.xpose.msra.mxu0 0
      %1104 = vmatprep.subr.bf16.mxu0 0
      %1105 = vmatpush2.bf16.xpose.msra.mxu0 0
      %1106 = vmatprep.subr.bf16.mxu0 0
      %1107 = vmatpush2.bf16.xpose.msra.mxu0 0
      %1108 = vmatprep.subr.bf16.mxu0 0
      %1109 = vmatpush2.bf16.xpose.msra.mxu0 0
      %1110 = vmatprep.subr.bf16.mxu0 0
      %1111 = vmatpush2.bf16.xpose.msra.mxu0 0
      %1112 = vmatprep.subr.bf16.mxu0 0
      %1113 = vmatpush2.bf16.xpose.msra.mxu0 0
      %1114 = vmatprep.mubr.bf16.mxu0 0
      %1115 = vmatmul.mubr.bf16.gmra.mxu0 %v1077
      %v1116 = vpop.f32.mrf.mxu0
      %v1117 = vadd.f32 0.0, %v1116
      %v1118 = vpop.f32.mrf.mxu0
      %v1119 = vpop.f32.mrf.mxu0
      %v1120 = vpop.f32.mrf.mxu0
      %1121 = vdwg.mxu0
      %1123 = vrot.lane.b32.xlu0 %v825, 96
      %v1124 = vpop.permute.xlu0 %1123
      %v1126 = vsel %vm830, %v817, 0
      %v1129 = vsel %vm830, %v1124, 0
      %1131 = vmatprep.subr.bf16.mxu0 0
      %1132 = vmatpush1.bf16.xpose.msra.mxu0 0
      %1133 = vmatprep.subr.bf16.mxu0 0
      %1134 = vmatpush1.bf16.xpose.msra.mxu0 0
      %1135 = vmatprep.subr.bf16.mxu0 0
      %1136 = vmatpush1.bf16.xpose.msra.mxu0 0
      %1137 = vmatprep.subr.bf16.mxu0 0
      %1138 = vmatpush1.bf16.xpose.msra.mxu0 0
      %1139 = vmatprep.subr.bf16.mxu0 0
      %1140 = vmatpush1.bf16.xpose.msra.mxu0 0
      %1141 = vmatprep.subr.bf16.mxu0 0
      %1142 = vmatpush1.bf16.xpose.msra.mxu0 0
      %1143 = vmatprep.subr.bf16.mxu0 0
      %1144 = vmatpush1.bf16.xpose.msra.mxu0 0
      %1145 = vmatprep.subr.bf16.mxu0 0
      %1146 = vmatpush1.bf16.xpose.msra.mxu0 %v1129
      %1147 = vmatprep.subr.bf16.mxu0 0
      %1148 = vmatpush2.bf16.xpose.msra.mxu0 0
      %1149 = vmatprep.subr.bf16.mxu0 0
      %1150 = vmatpush2.bf16.xpose.msra.mxu0 0
      %1151 = vmatprep.subr.bf16.mxu0 0
      %1152 = vmatpush2.bf16.xpose.msra.mxu0 0
      %1153 = vmatprep.subr.bf16.mxu0 0
      %1154 = vmatpush2.bf16.xpose.msra.mxu0 0
      %1155 = vmatprep.subr.bf16.mxu0 0
      %1156 = vmatpush2.bf16.xpose.msra.mxu0 0
      %1157 = vmatprep.subr.bf16.mxu0 0
      %1158 = vmatpush2.bf16.xpose.msra.mxu0 0
      %1159 = vmatprep.subr.bf16.mxu0 0
      %1160 = vmatpush2.bf16.xpose.msra.mxu0 0
      %1161 = vmatprep.subr.bf16.mxu0 0
      %1162 = vmatpush2.bf16.xpose.msra.mxu0 0
      %1163 = vmatprep.mubr.bf16.mxu0 0
      %1164 = vmatmul.mubr.bf16.gmra.mxu0 %v1126
      %v1165 = vpop.f32.mrf.mxu0
      %v1166 = vadd.f32 0.0, %v1165
      %v1167 = vpop.f32.mrf.mxu0
      %v1168 = vpop.f32.mrf.mxu0
      %v1169 = vpop.f32.mrf.mxu0
      %1170 = vdwg.mxu0
      %1172 = vrot.lane.b32.xlu0 %v826, 96
      %v1173 = vpop.permute.xlu0 %1172
      %v1175 = vsel %vm830, %v818, 0
      %v1178 = vsel %vm830, %v1173, 0
      %1180 = vmatprep.subr.bf16.mxu0 0
      %1181 = vmatpush1.bf16.xpose.msra.mxu0 0
      %1182 = vmatprep.subr.bf16.mxu0 0
      %1183 = vmatpush1.bf16.xpose.msra.mxu0 0
      %1184 = vmatprep.subr.bf16.mxu0 0
      %1185 = vmatpush1.bf16.xpose.msra.mxu0 0
      %1186 = vmatprep.subr.bf16.mxu0 0
      %1187 = vmatpush1.bf16.xpose.msra.mxu0 0
      %1188 = vmatprep.subr.bf16.mxu0 0
      %1189 = vmatpush1.bf16.xpose.msra.mxu0 0
      %1190 = vmatprep.subr.bf16.mxu0 0
      %1191 = vmatpush1.bf16.xpose.msra.mxu0 0
      %1192 = vmatprep.subr.bf16.mxu0 0
      %1193 = vmatpush1.bf16.xpose.msra.mxu0 0
      %1194 = vmatprep.subr.bf16.mxu0 0
      %1195 = vmatpush1.bf16.xpose.msra.mxu0 %v1178
      %1196 = vmatprep.subr.bf16.mxu0 0
      %1197 = vmatpush2.bf16.xpose.msra.mxu0 0
      %1198 = vmatprep.subr.bf16.mxu0 0
      %1199 = vmatpush2.bf16.xpose.msra.mxu0 0
      %1200 = vmatprep.subr.bf16.mxu0 0
      %1201 = vmatpush2.bf16.xpose.msra.mxu0 0
      %1202 = vmatprep.subr.bf16.mxu0 0
      %1203 = vmatpush2.bf16.xpose.msra.mxu0 0
      %1204 = vmatprep.subr.bf16.mxu0 0
      %1205 = vmatpush2.bf16.xpose.msra.mxu0 0
      %1206 = vmatprep.subr.bf16.mxu0 0
      %1207 = vmatpush2.bf16.xpose.msra.mxu0 0
      %1208 = vmatprep.subr.bf16.mxu0 0
      %1209 = vmatpush2.bf16.xpose.msra.mxu0 0
      %1210 = vmatprep.subr.bf16.mxu0 0
      %1211 = vmatpush2.bf16.xpose.msra.mxu0 0
      %1212 = vmatprep.mubr.bf16.mxu0 0
      %1213 = vmatmul.mubr.bf16.gmra.mxu0 %v1175
      %v1214 = vpop.f32.mrf.mxu0
      %v1215 = vadd.f32 0.0, %v1214
      %v1216 = vpop.f32.mrf.mxu0
      %v1217 = vpop.f32.mrf.mxu0
      %v1218 = vpop.f32.mrf.mxu0
      %1219 = vdwg.mxu0
      %v1220 = vadd.f32 %v872, %v800
      %v1221 = vadd.f32 %v921, %v800
      %v1222 = vadd.f32 %v970, %v800
      %v1223 = vadd.f32 %v1019, %v800
      %v1224 = vadd.f32 %v1068, %v800
      %v1225 = vadd.f32 %v1117, %v800
      %v1226 = vadd.f32 %v1166, %v800
      %v1227 = vadd.f32 %v1215, %v800
      %v1230 = vlaneseq
      %v1231 = vshrl.u32 %v1230, 7
      %v1232 = vsub.s32 0, %v1231
      %v1233 = vrot.slane %v801, %v1232
      %v1234 = vlaneseq
      %v1235 = vshrl.u32 %v1234, 7
      %v1236 = vsub.s32 0, %v1235
      %v1237 = vrot.slane %v802, %v1236
      %v1240 = vadd.f32 %v1220, %v1233
      %v1241 = vadd.f32 %v1221, %v1233
      %v1242 = vadd.f32 %v1222, %v1233
      %v1243 = vadd.f32 %v1223, %v1233
      %v1244 = vadd.f32 %v1224, %v1237
      %v1245 = vadd.f32 %v1225, %v1237
      %v1246 = vadd.f32 %v1226, %v1237
      %v1247 = vadd.f32 %v1227, %v1237
      %v1248 = vsel %vm830, %v1240, -inf
      %1249 = vmax.xlane.f32.xlu0 %v1248
      %v1250 = vpop.xlane.xlu0 %1249
      %v1251 = vsel %vm830, %v1241, -inf
      %1252 = vmax.xlane.f32.xlu0 %v1251
      %v1253 = vpop.xlane.xlu0 %1252
      %v1254 = vsel %vm830, %v1242, -inf
      %1255 = vmax.xlane.f32.xlu0 %v1254
      %v1256 = vpop.xlane.xlu0 %1255
      %v1257 = vsel %vm830, %v1243, -inf
      %1258 = vmax.xlane.f32.xlu0 %v1257
      %v1259 = vpop.xlane.xlu0 %1258
      %v1260 = vsel %vm830, %v1244, -inf
      %1261 = vmax.xlane.f32.xlu0 %v1260
      %v1262 = vpop.xlane.xlu0 %1261
      %v1263 = vsel %vm830, %v1245, -inf
      %1264 = vmax.xlane.f32.xlu0 %v1263
      %v1265 = vpop.xlane.xlu0 %1264
      %v1266 = vsel %vm830, %v1246, -inf
      %1267 = vmax.xlane.f32.xlu0 %v1266
      %v1268 = vpop.xlane.xlu0 %1267
      %v1269 = vsel %vm830, %v1247, -inf
      %1270 = vmax.xlane.f32.xlu0 %v1269
      %v1271 = vpop.xlane.xlu0 %1270
      %v1272 = vsub.f32 %v1240, %v1250
      %v1273 = vsub.f32 %v1241, %v1253
      %v1274 = vsub.f32 %v1242, %v1256
      %v1275 = vsub.f32 %v1243, %v1259
      %v1276 = vsub.f32 %v1244, %v1262
      %v1277 = vsub.f32 %v1245, %v1265
      %v1278 = vsub.f32 %v1246, %v1268
      %v1279 = vsub.f32 %v1247, %v1271
      %v1280 = vmul.f32 %v1272, 1.442695
      %v1281 = vpow.pop %v1280
      %v1282 = vmul.f32 %v1273, 1.442695
      %v1283 = vpow.pop %v1282
      %v1284 = vmul.f32 %v1274, 1.442695
      %v1285 = vpow.pop %v1284
      %v1286 = vmul.f32 %v1275, 1.442695
      %v1287 = vpow.pop %v1286
      %v1288 = vmul.f32 %v1276, 1.442695
      %v1289 = vpow.pop %v1288
      %v1290 = vmul.f32 %v1277, 1.442695
      %v1291 = vpow.pop %v1290
      %v1292 = vmul.f32 %v1278, 1.442695
      %v1293 = vpow.pop %v1292
      %v1294 = vmul.f32 %v1279, 1.442695
      %v1295 = vpow.pop %v1294
      %v1296 = vsel %vm830, %v1281, 0.0
      %1297 = vadd.xlane.f32.xlu0 %v1296
      %v1298 = vpop.xlane.xlu0 %1297
      %v1299 = vsel %vm830, %v1283, 0.0
      %1300 = vadd.xlane.f32.xlu0 %v1299
      %v1301 = vpop.xlane.xlu0 %1300
      %v1302 = vsel %vm830, %v1285, 0.0
      %1303 = vadd.xlane.f32.xlu0 %v1302
      %v1304 = vpop.xlane.xlu0 %1303
      %v1305 = vsel %vm830, %v1287, 0.0
      %1306 = vadd.xlane.f32.xlu0 %v1305
      %v1307 = vpop.xlane.xlu0 %1306
      %v1308 = vsel %vm830, %v1289, 0.0
      %1309 = vadd.xlane.f32.xlu0 %v1308
      %v1310 = vpop.xlane.xlu0 %1309
      %v1311 = vsel %vm830, %v1291, 0.0
      %1312 = vadd.xlane.f32.xlu0 %v1311
      %v1313 = vpop.xlane.xlu0 %1312
      %v1314 = vsel %vm830, %v1293, 0.0
      %1315 = vadd.xlane.f32.xlu0 %v1314
      %v1316 = vpop.xlane.xlu0 %1315
      %v1317 = vsel %vm830, %v1295, 0.0
      %1318 = vadd.xlane.f32.xlu0 %v1317
      %v1319 = vpop.xlane.xlu0 %1318
      %v1320 = vrcp.pop %v1298
      %v1321 = vrcp.pop %v1301
      %v1322 = vrcp.pop %v1304
      %v1323 = vrcp.pop %v1307
      %v1324 = vrcp.pop %v1310
      %v1325 = vrcp.pop %v1313
      %v1326 = vrcp.pop %v1316
      %v1327 = vrcp.pop %v1319
      %v1328 = vmul.f32 %v1281, %v1320
      %v1329 = vmul.f32 %v1283, %v1321
      %v1330 = vmul.f32 %v1285, %v1322
      %v1331 = vmul.f32 %v1287, %v1323
      %v1332 = vmul.f32 %v1289, %v1324
      %v1333 = vmul.f32 %v1291, %v1325
      %v1334 = vmul.f32 %v1293, %v1326
      %v1335 = vmul.f32 %v1295, %v1327
      %v1336 = vpack.c.bf16 %v1328, %v1328
      %v1337 = vpack.c.bf16 %v1329, %v1329
      %v1338 = vpack.c.bf16 %v1330, %v1330
      %v1339 = vpack.c.bf16 %v1331, %v1331
      %v1340 = vpack.c.bf16 %v1332, %v1332
      %v1341 = vpack.c.bf16 %v1333, %v1333
      %v1342 = vpack.c.bf16 %v1334, %v1334
      %v1343 = vpack.c.bf16 %v1335, %v1335
      %1344 = vrot.lane.b32.xlu0 %v819, 64
      %v1345 = vpop.permute.xlu0 %1344
      %v1347 = vsel %vm830, %v1336, 0
      %vm1349 = vcmask 1043456
      %v1351 = vsel %vm1349, %v1345, 0
      %1353 = vmatprep.subr.bf16.mxu0 0
      %1354 = vmatpush1.bf16.msra.mxu0 0
      %1355 = vmatprep.subr.bf16.mxu0 0
      %1356 = vmatpush1.bf16.msra.mxu0 0
      %1357 = vmatprep.subr.bf16.mxu0 0
      %1358 = vmatpush1.bf16.msra.mxu0 0
      %1359 = vmatprep.subr.bf16.mxu0 0
      %1360 = vmatpush1.bf16.msra.mxu0 0
      %1361 = vmatprep.subr.bf16.mxu0 0
      %1362 = vmatpush1.bf16.msra.mxu0 0
      %1363 = vmatprep.subr.bf16.mxu0 0
      %1364 = vmatpush1.bf16.msra.mxu0 0
      %1365 = vmatprep.subr.bf16.mxu0 0
      %1366 = vmatpush1.bf16.msra.mxu0 0
      %1367 = vmatprep.subr.bf16.mxu0 0
      %1368 = vmatpush1.bf16.msra.mxu0 %v1351
      %1369 = vmatprep.subr.bf16.mxu0 0
      %1370 = vmatpush2.bf16.msra.mxu0 0
      %1371 = vmatprep.subr.bf16.mxu0 0
      %1372 = vmatpush2.bf16.msra.mxu0 0
      %1373 = vmatprep.subr.bf16.mxu0 0
      %1374 = vmatpush2.bf16.msra.mxu0 0
      %1375 = vmatprep.subr.bf16.mxu0 0
      %1376 = vmatpush2.bf16.msra.mxu0 0
      %1377 = vmatprep.subr.bf16.mxu0 0
      %1378 = vmatpush2.bf16.msra.mxu0 0
      %1379 = vmatprep.subr.bf16.mxu0 0
      %1380 = vmatpush2.bf16.msra.mxu0 0
      %1381 = vmatprep.subr.bf16.mxu0 0
      %1382 = vmatpush2.bf16.msra.mxu0 0
      %1383 = vmatprep.subr.bf16.mxu0 0
      %1384 = vmatpush2.bf16.msra.mxu0 0
      %1385 = vmatprep.mubr.bf16.mxu0 0
      %1386 = vmatmul.mubr.bf16.gmra.mxu0 %v1347
      %v1387 = vpop.f32.mrf.mxu0
      %v1388 = vadd.f32 0.0, %v1387
      %v1389 = vpop.f32.mrf.mxu0
      %v1390 = vpop.f32.mrf.mxu0
      %v1391 = vpop.f32.mrf.mxu0
      %1392 = vdwg.mxu0
      %1393 = vrot.lane.b32.xlu0 %v820, 64
      %v1394 = vpop.permute.xlu0 %1393
      %v1396 = vsel %vm830, %v1337, 0
      %v1399 = vsel %vm1349, %v1394, 0
      %1401 = vmatprep.subr.bf16.mxu0 0
      %1402 = vmatpush1.bf16.msra.mxu0 0
      %1403 = vmatprep.subr.bf16.mxu0 0
      %1404 = vmatpush1.bf16.msra.mxu0 0
      %1405 = vmatprep.subr.bf16.mxu0 0
      %1406 = vmatpush1.bf16.msra.mxu0 0
      %1407 = vmatprep.subr.bf16.mxu0 0
      %1408 = vmatpush1.bf16.msra.mxu0 0
      %1409 = vmatprep.subr.bf16.mxu0 0
      %1410 = vmatpush1.bf16.msra.mxu0 0
      %1411 = vmatprep.subr.bf16.mxu0 0
      %1412 = vmatpush1.bf16.msra.mxu0 0
      %1413 = vmatprep.subr.bf16.mxu0 0
      %1414 = vmatpush1.bf16.msra.mxu0 0
      %1415 = vmatprep.subr.bf16.mxu0 0
      %1416 = vmatpush1.bf16.msra.mxu0 %v1399
      %1417 = vmatprep.subr.bf16.mxu0 0
      %1418 = vmatpush2.bf16.msra.mxu0 0
      %1419 = vmatprep.subr.bf16.mxu0 0
      %1420 = vmatpush2.bf16.msra.mxu0 0
      %1421 = vmatprep.subr.bf16.mxu0 0
      %1422 = vmatpush2.bf16.msra.mxu0 0
      %1423 = vmatprep.subr.bf16.mxu0 0
      %1424 = vmatpush2.bf16.msra.mxu0 0
      %1425 = vmatprep.subr.bf16.mxu0 0
      %1426 = vmatpush2.bf16.msra.mxu0 0
      %1427 = vmatprep.subr.bf16.mxu0 0
      %1428 = vmatpush2.bf16.msra.mxu0 0
      %1429 = vmatprep.subr.bf16.mxu0 0
      %1430 = vmatpush2.bf16.msra.mxu0 0
      %1431 = vmatprep.subr.bf16.mxu0 0
      %1432 = vmatpush2.bf16.msra.mxu0 0
      %1433 = vmatprep.mubr.bf16.mxu0 0
      %1434 = vmatmul.mubr.bf16.gmra.mxu0 %v1396
      %v1435 = vpop.f32.mrf.mxu0
      %v1436 = vadd.f32 0.0, %v1435
      %v1437 = vpop.f32.mrf.mxu0
      %v1438 = vpop.f32.mrf.mxu0
      %v1439 = vpop.f32.mrf.mxu0
      %1440 = vdwg.mxu0
      %1441 = vrot.lane.b32.xlu0 %v821, 64
      %v1442 = vpop.permute.xlu0 %1441
      %v1444 = vsel %vm830, %v1338, 0
      %v1447 = vsel %vm1349, %v1442, 0
      %1449 = vmatprep.subr.bf16.mxu0 0
      %1450 = vmatpush1.bf16.msra.mxu0 0
      %1451 = vmatprep.subr.bf16.mxu0 0
      %1452 = vmatpush1.bf16.msra.mxu0 0
      %1453 = vmatprep.subr.bf16.mxu0 0
      %1454 = vmatpush1.bf16.msra.mxu0 0
      %1455 = vmatprep.subr.bf16.mxu0 0
      %1456 = vmatpush1.bf16.msra.mxu0 0
      %1457 = vmatprep.subr.bf16.mxu0 0
      %1458 = vmatpush1.bf16.msra.mxu0 0
      %1459 = vmatprep.subr.bf16.mxu0 0
      %1460 = vmatpush1.bf16.msra.mxu0 0
      %1461 = vmatprep.subr.bf16.mxu0 0
      %1462 = vmatpush1.bf16.msra.mxu0 0
      %1463 = vmatprep.subr.bf16.mxu0 0
      %1464 = vmatpush1.bf16.msra.mxu0 %v1447
      %1465 = vmatprep.subr.bf16.mxu0 0
      %1466 = vmatpush2.bf16.msra.mxu0 0
      %1467 = vmatprep.subr.bf16.mxu0 0
      %1468 = vmatpush2.bf16.msra.mxu0 0
      %1469 = vmatprep.subr.bf16.mxu0 0
      %1470 = vmatpush2.bf16.msra.mxu0 0
      %1471 = vmatprep.subr.bf16.mxu0 0
      %1472 = vmatpush2.bf16.msra.mxu0 0
      %1473 = vmatprep.subr.bf16.mxu0 0
      %1474 = vmatpush2.bf16.msra.mxu0 0
      %1475 = vmatprep.subr.bf16.mxu0 0
      %1476 = vmatpush2.bf16.msra.mxu0 0
      %1477 = vmatprep.subr.bf16.mxu0 0
      %1478 = vmatpush2.bf16.msra.mxu0 0
      %1479 = vmatprep.subr.bf16.mxu0 0
      %1480 = vmatpush2.bf16.msra.mxu0 0
      %1481 = vmatprep.mubr.bf16.mxu0 0
      %1482 = vmatmul.mubr.bf16.gmra.mxu0 %v1444
      %v1483 = vpop.f32.mrf.mxu0
      %v1484 = vadd.f32 0.0, %v1483
      %v1485 = vpop.f32.mrf.mxu0
      %v1486 = vpop.f32.mrf.mxu0
      %v1487 = vpop.f32.mrf.mxu0
      %1488 = vdwg.mxu0
      %1489 = vrot.lane.b32.xlu0 %v822, 64
      %v1490 = vpop.permute.xlu0 %1489
      %v1492 = vsel %vm830, %v1339, 0
      %v1495 = vsel %vm1349, %v1490, 0
      %1497 = vmatprep.subr.bf16.mxu0 0
      %1498 = vmatpush1.bf16.msra.mxu0 0
      %1499 = vmatprep.subr.bf16.mxu0 0
      %1500 = vmatpush1.bf16.msra.mxu0 0
      %1501 = vmatprep.subr.bf16.mxu0 0
      %1502 = vmatpush1.bf16.msra.mxu0 0
      %1503 = vmatprep.subr.bf16.mxu0 0
      %1504 = vmatpush1.bf16.msra.mxu0 0
      %1505 = vmatprep.subr.bf16.mxu0 0
      %1506 = vmatpush1.bf16.msra.mxu0 0
      %1507 = vmatprep.subr.bf16.mxu0 0
      %1508 = vmatpush1.bf16.msra.mxu0 0
      %1509 = vmatprep.subr.bf16.mxu0 0
      %1510 = vmatpush1.bf16.msra.mxu0 0
      %1511 = vmatprep.subr.bf16.mxu0 0
      %1512 = vmatpush1.bf16.msra.mxu0 %v1495
      %1513 = vmatprep.subr.bf16.mxu0 0
      %1514 = vmatpush2.bf16.msra.mxu0 0
      %1515 = vmatprep.subr.bf16.mxu0 0
      %1516 = vmatpush2.bf16.msra.mxu0 0
      %1517 = vmatprep.subr.bf16.mxu0 0
      %1518 = vmatpush2.bf16.msra.mxu0 0
      %1519 = vmatprep.subr.bf16.mxu0 0
      %1520 = vmatpush2.bf16.msra.mxu0 0
      %1521 = vmatprep.subr.bf16.mxu0 0
      %1522 = vmatpush2.bf16.msra.mxu0 0
      %1523 = vmatprep.subr.bf16.mxu0 0
      %1524 = vmatpush2.bf16.msra.mxu0 0
      %1525 = vmatprep.subr.bf16.mxu0 0
      %1526 = vmatpush2.bf16.msra.mxu0 0
      %1527 = vmatprep.subr.bf16.mxu0 0
      %1528 = vmatpush2.bf16.msra.mxu0 0
      %1529 = vmatprep.mubr.bf16.mxu0 0
      %1530 = vmatmul.mubr.bf16.gmra.mxu0 %v1492
      %v1531 = vpop.f32.mrf.mxu0
      %v1532 = vadd.f32 0.0, %v1531
      %v1533 = vpop.f32.mrf.mxu0
      %v1534 = vpop.f32.mrf.mxu0
      %v1535 = vpop.f32.mrf.mxu0
      %1536 = vdwg.mxu0
      %1537 = vrot.lane.b32.xlu0 %v823, 64
      %v1538 = vpop.permute.xlu0 %1537
      %v1540 = vsel %vm830, %v1340, 0
      %v1543 = vsel %vm1349, %v1538, 0
      %1545 = vmatprep.subr.bf16.mxu0 0
      %1546 = vmatpush1.bf16.msra.mxu0 0
      %1547 = vmatprep.subr.bf16.mxu0 0
      %1548 = vmatpush1.bf16.msra.mxu0 0
      %1549 = vmatprep.subr.bf16.mxu0 0
      %1550 = vmatpush1.bf16.msra.mxu0 0
      %1551 = vmatprep.subr.bf16.mxu0 0
      %1552 = vmatpush1.bf16.msra.mxu0 0
      %1553 = vmatprep.subr.bf16.mxu0 0
      %1554 = vmatpush1.bf16.msra.mxu0 0
      %1555 = vmatprep.subr.bf16.mxu0 0
      %1556 = vmatpush1.bf16.msra.mxu0 0
      %1557 = vmatprep.subr.bf16.mxu0 0
      %1558 = vmatpush1.bf16.msra.mxu0 0
      %1559 = vmatprep.subr.bf16.mxu0 0
      %1560 = vmatpush1.bf16.msra.mxu0 %v1543
      %1561 = vmatprep.subr.bf16.mxu0 0
      %1562 = vmatpush2.bf16.msra.mxu0 0
      %1563 = vmatprep.subr.bf16.mxu0 0
      %1564 = vmatpush2.bf16.msra.mxu0 0
      %1565 = vmatprep.subr.bf16.mxu0 0
      %1566 = vmatpush2.bf16.msra.mxu0 0
      %1567 = vmatprep.subr.bf16.mxu0 0
      %1568 = vmatpush2.bf16.msra.mxu0 0
      %1569 = vmatprep.subr.bf16.mxu0 0
      %1570 = vmatpush2.bf16.msra.mxu0 0
      %1571 = vmatprep.subr.bf16.mxu0 0
      %1572 = vmatpush2.bf16.msra.mxu0 0
      %1573 = vmatprep.subr.bf16.mxu0 0
      %1574 = vmatpush2.bf16.msra.mxu0 0
      %1575 = vmatprep.subr.bf16.mxu0 0
      %1576 = vmatpush2.bf16.msra.mxu0 0
      %1577 = vmatprep.mubr.bf16.mxu0 0
      %1578 = vmatmul.mubr.bf16.gmra.mxu0 %v1540
      %v1579 = vpop.f32.mrf.mxu0
      %v1580 = vadd.f32 0.0, %v1579
      %v1581 = vpop.f32.mrf.mxu0
      %v1582 = vpop.f32.mrf.mxu0
      %v1583 = vpop.f32.mrf.mxu0
      %1584 = vdwg.mxu0
      %1585 = vrot.lane.b32.xlu0 %v824, 64
      %v1586 = vpop.permute.xlu0 %1585
      %v1588 = vsel %vm830, %v1341, 0
      %v1591 = vsel %vm1349, %v1586, 0
      %1593 = vmatprep.subr.bf16.mxu0 0
      %1594 = vmatpush1.bf16.msra.mxu0 0
      %1595 = vmatprep.subr.bf16.mxu0 0
      %1596 = vmatpush1.bf16.msra.mxu0 0
      %1597 = vmatprep.subr.bf16.mxu0 0
      %1598 = vmatpush1.bf16.msra.mxu0 0
      %1599 = vmatprep.subr.bf16.mxu0 0
      %1600 = vmatpush1.bf16.msra.mxu0 0
      %1601 = vmatprep.subr.bf16.mxu0 0
      %1602 = vmatpush1.bf16.msra.mxu0 0
      %1603 = vmatprep.subr.bf16.mxu0 0
      %1604 = vmatpush1.bf16.msra.mxu0 0
      %1605 = vmatprep.subr.bf16.mxu0 0
      %1606 = vmatpush1.bf16.msra.mxu0 0
      %1607 = vmatprep.subr.bf16.mxu0 0
      %1608 = vmatpush1.bf16.msra.mxu0 %v1591
      %1609 = vmatprep.subr.bf16.mxu0 0
      %1610 = vmatpush2.bf16.msra.mxu0 0
      %1611 = vmatprep.subr.bf16.mxu0 0
      %1612 = vmatpush2.bf16.msra.mxu0 0
      %1613 = vmatprep.subr.bf16.mxu0 0
      %1614 = vmatpush2.bf16.msra.mxu0 0
      %1615 = vmatprep.subr.bf16.mxu0 0
      %1616 = vmatpush2.bf16.msra.mxu0 0
      %1617 = vmatprep.subr.bf16.mxu0 0
      %1618 = vmatpush2.bf16.msra.mxu0 0
      %1619 = vmatprep.subr.bf16.mxu0 0
      %1620 = vmatpush2.bf16.msra.mxu0 0
      %1621 = vmatprep.subr.bf16.mxu0 0
      %1622 = vmatpush2.bf16.msra.mxu0 0
      %1623 = vmatprep.subr.bf16.mxu0 0
      %1624 = vmatpush2.bf16.msra.mxu0 0
      %1625 = vmatprep.mubr.bf16.mxu0 0
      %1626 = vmatmul.mubr.bf16.gmra.mxu0 %v1588
      %v1627 = vpop.f32.mrf.mxu0
      %v1628 = vadd.f32 0.0, %v1627
      %v1629 = vpop.f32.mrf.mxu0
      %v1630 = vpop.f32.mrf.mxu0
      %v1631 = vpop.f32.mrf.mxu0
      %1632 = vdwg.mxu0
      %1633 = vrot.lane.b32.xlu0 %v825, 64
      %v1634 = vpop.permute.xlu0 %1633
      %v1636 = vsel %vm830, %v1342, 0
      %v1639 = vsel %vm1349, %v1634, 0
      %1641 = vmatprep.subr.bf16.mxu0 0
      %1642 = vmatpush1.bf16.msra.mxu0 0
      %1643 = vmatprep.subr.bf16.mxu0 0
      %1644 = vmatpush1.bf16.msra.mxu0 0
      %1645 = vmatprep.subr.bf16.mxu0 0
      %1646 = vmatpush1.bf16.msra.mxu0 0
      %1647 = vmatprep.subr.bf16.mxu0 0
      %1648 = vmatpush1.bf16.msra.mxu0 0
      %1649 = vmatprep.subr.bf16.mxu0 0
      %1650 = vmatpush1.bf16.msra.mxu0 0
      %1651 = vmatprep.subr.bf16.mxu0 0
      %1652 = vmatpush1.bf16.msra.mxu0 0
      %1653 = vmatprep.subr.bf16.mxu0 0
      %1654 = vmatpush1.bf16.msra.mxu0 0
      %1655 = vmatprep.subr.bf16.mxu0 0
      %1656 = vmatpush1.bf16.msra.mxu0 %v1639
      %1657 = vmatprep.subr.bf16.mxu0 0
      %1658 = vmatpush2.bf16.msra.mxu0 0
      %1659 = vmatprep.subr.bf16.mxu0 0
      %1660 = vmatpush2.bf16.msra.mxu0 0
      %1661 = vmatprep.subr.bf16.mxu0 0
      %1662 = vmatpush2.bf16.msra.mxu0 0
      %1663 = vmatprep.subr.bf16.mxu0 0
      %1664 = vmatpush2.bf16.msra.mxu0 0
      %1665 = vmatprep.subr.bf16.mxu0 0
      %1666 = vmatpush2.bf16.msra.mxu0 0
      %1667 = vmatprep.subr.bf16.mxu0 0
      %1668 = vmatpush2.bf16.msra.mxu0 0
      %1669 = vmatprep.subr.bf16.mxu0 0
      %1670 = vmatpush2.bf16.msra.mxu0 0
      %1671 = vmatprep.subr.bf16.mxu0 0
      %1672 = vmatpush2.bf16.msra.mxu0 0
      %1673 = vmatprep.mubr.bf16.mxu0 0
      %1674 = vmatmul.mubr.bf16.gmra.mxu0 %v1636
      %v1675 = vpop.f32.mrf.mxu0
      %v1676 = vadd.f32 0.0, %v1675
      %v1677 = vpop.f32.mrf.mxu0
      %v1678 = vpop.f32.mrf.mxu0
      %v1679 = vpop.f32.mrf.mxu0
      %1680 = vdwg.mxu0
      %1681 = vrot.lane.b32.xlu0 %v826, 64
      %v1682 = vpop.permute.xlu0 %1681
      %v1684 = vsel %vm830, %v1343, 0
      %v1687 = vsel %vm1349, %v1682, 0
      %1689 = vmatprep.subr.bf16.mxu0 0
      %1690 = vmatpush1.bf16.msra.mxu0 0
      %1691 = vmatprep.subr.bf16.mxu0 0
      %1692 = vmatpush1.bf16.msra.mxu0 0
      %1693 = vmatprep.subr.bf16.mxu0 0
      %1694 = vmatpush1.bf16.msra.mxu0 0
      %1695 = vmatprep.subr.bf16.mxu0 0
      %1696 = vmatpush1.bf16.msra.mxu0 0
      %1697 = vmatprep.subr.bf16.mxu0 0
      %1698 = vmatpush1.bf16.msra.mxu0 0
      %1699 = vmatprep.subr.bf16.mxu0 0
      %1700 = vmatpush1.bf16.msra.mxu0 0
      %1701 = vmatprep.subr.bf16.mxu0 0
      %1702 = vmatpush1.bf16.msra.mxu0 0
      %1703 = vmatprep.subr.bf16.mxu0 0
      %1704 = vmatpush1.bf16.msra.mxu0 %v1687
      %1705 = vmatprep.subr.bf16.mxu0 0
      %1706 = vmatpush2.bf16.msra.mxu0 0
      %1707 = vmatprep.subr.bf16.mxu0 0
      %1708 = vmatpush2.bf16.msra.mxu0 0
      %1709 = vmatprep.subr.bf16.mxu0 0
      %1710 = vmatpush2.bf16.msra.mxu0 0
      %1711 = vmatprep.subr.bf16.mxu0 0
      %1712 = vmatpush2.bf16.msra.mxu0 0
      %1713 = vmatprep.subr.bf16.mxu0 0
      %1714 = vmatpush2.bf16.msra.mxu0 0
      %1715 = vmatprep.subr.bf16.mxu0 0
      %1716 = vmatpush2.bf16.msra.mxu0 0
      %1717 = vmatprep.subr.bf16.mxu0 0
      %1718 = vmatpush2.bf16.msra.mxu0 0
      %1719 = vmatprep.subr.bf16.mxu0 0
      %1720 = vmatpush2.bf16.msra.mxu0 0
      %1721 = vmatprep.mubr.bf16.mxu0 0
      %1722 = vmatmul.mubr.bf16.gmra.mxu0 %v1684
      %v1723 = vpop.f32.mrf.mxu0
      %v1724 = vadd.f32 0.0, %v1723
      %v1725 = vpop.f32.mrf.mxu0
      %v1726 = vpop.f32.mrf.mxu0
      %v1727 = vpop.f32.mrf.mxu0
      %1728 = vdwg.mxu0
      %v1729 = vpack.c.bf16 %v1388, %v1388
      %vm1730 = vcmask 60416
      %1731 = vst.msk [vmem:[#allocation2] sm:$0xf] %vm1730, %v1729
      %v1732 = vpack.c.bf16 %v1436, %v1436
      %v1734 = vunpack.c.l.b16 %v1732
      %v1735 = vpack.c.b16 %v1734, %v1734
      %1736 = vrot.lane.b32.xlu0 %v1735, 8
      %v1737 = vpop.permute.xlu0 %1736
      %vm1739 = vcmask 126016
      %1740 = vst.msk [vmem:[#allocation2] sm:$0xf] %vm1739, %v1737
      %v1741 = vpack.c.bf16 %v1484, %v1484
      %v1743 = vunpack.c.l.b16 %v1741
      %v1744 = vpack.c.b16 %v1743, %v1743
      %1745 = vrot.lane.b32.xlu0 %v1744, 16
      %v1746 = vpop.permute.xlu0 %1745
      %vm1748 = vcmask 191616
      %1749 = vst.msk [vmem:[#allocation2] sm:$0xf] %vm1748, %v1746
      %v1750 = vpack.c.bf16 %v1532, %v1532
      %v1752 = vunpack.c.l.b16 %v1750
      %v1753 = vpack.c.b16 %v1752, %v1752
      %1754 = vrot.lane.b32.xlu0 %v1753, 24
      %v1755 = vpop.permute.xlu0 %1754
      %vm1757 = vcmask 257216
      %1758 = vst.msk [vmem:[#allocation2] sm:$0xf] %vm1757, %v1755
      %v1759 = vpack.c.bf16 %v1580, %v1580
      %1760 = vst.msk [vmem:[#allocation2 + $0x4] sm:$0xf] %vm1730, %v1759
      %v1761 = vpack.c.bf16 %v1628, %v1628
      %v1763 = vunpack.c.l.b16 %v1761
      %v1764 = vpack.c.b16 %v1763, %v1763
      %1765 = vrot.lane.b32.xlu0 %v1764, 8
      %v1766 = vpop.permute.xlu0 %1765
      %1768 = vst.msk [vmem:[#allocation2 + $0x4] sm:$0xf] %vm1739, %v1766
      %v1769 = vpack.c.bf16 %v1676, %v1676
      %v1771 = vunpack.c.l.b16 %v1769
      %v1772 = vpack.c.b16 %v1771, %v1771
      %1773 = vrot.lane.b32.xlu0 %v1772, 16
      %v1774 = vpop.permute.xlu0 %1773
      %1776 = vst.msk [vmem:[#allocation2 + $0x4] sm:$0xf] %vm1748, %v1774
      %v1777 = vpack.c.bf16 %v1724, %v1724
      %v1779 = vunpack.c.l.b16 %v1777
      %v1780 = vpack.c.b16 %v1779, %v1779
      %1781 = vrot.lane.b32.xlu0 %v1780, 24
      %v1782 = vpop.permute.xlu0 %1781
      %1784 = vst.msk [vmem:[#allocation2 + $0x4] sm:$0xf] %vm1757, %v1782
      %v1785 = vld [vmem:[#allocation2] sm:$0xf]
      %v1786 = vld [vmem:[#allocation2 + $0x4] sm:$0xf]
      %v1787 = vld [vmem:[%s656] sm:$0xf]
      %v1788 = vld [vmem:[%s656 + $0x4] sm:$0xf]
      %v1789 = vld [vmem:[%s656 + $0x8] sm:$0xf]
      %v1790 = vld [vmem:[%s656 + $0xc] sm:$0xf]
      %v1791 = vld [vmem:[%s659] sm:$0x1]
      %v1793 = vlaneseq
      %v1794 = vshrl.u32 %v1793, 7
      %v1795 = vsub.s32 0, %v1794
      %v1796 = vrot.slane %v1791, %v1795
      %v1800 = vunpack.c.l.b16 %v1785
      %v1801 = vunpack.c.l.b16 %v1786
      %v1802 = vpack.c.b16 %v1801, %v1800
      %v1807 = vunpack.c.l.b16 %v1787
      %v1808 = vunpack.c.l.b16 %v1788
      %v1809 = vunpack.c.l.b16 %v1789
      %v1810 = vunpack.c.l.b16 %v1790
      %v1811 = vpack.c.b16 %v1808, %v1807
      %v1812 = vpack.c.b16 %v1810, %v1809
      %v1816 = vsel %vm730, %v1802, 0
      %1818 = vmatprep.subr.bf16.mxu0 0
      %1819 = vmatpush1.bf16.msra.mxu0 0
      %1820 = vmatprep.subr.bf16.mxu0 0
      %1821 = vmatpush1.bf16.msra.mxu0 0
      %1822 = vmatprep.subr.bf16.mxu0 0
      %1823 = vmatpush1.bf16.msra.mxu0 0
      %1824 = vmatprep.subr.bf16.mxu0 0
      %1825 = vmatpush1.bf16.msra.mxu0 0
      %1826 = vmatprep.subr.bf16.mxu0 0
      %1827 = vmatpush1.bf16.msra.mxu0 0
      %1828 = vmatprep.subr.bf16.mxu0 0
      %1829 = vmatpush1.bf16.msra.mxu0 0
      %1830 = vmatprep.subr.bf16.mxu0 0
      %1831 = vmatpush1.bf16.msra.mxu0 %v1812
      %1832 = vmatprep.subr.bf16.mxu0 0
      %1833 = vmatpush1.bf16.msra.mxu0 %v1811
      %1834 = vmatprep.subr.bf16.mxu0 0
      %1835 = vmatpush2.bf16.msra.mxu0 0
      %1836 = vmatprep.subr.bf16.mxu0 0
      %1837 = vmatpush2.bf16.msra.mxu0 0
      %1838 = vmatprep.subr.bf16.mxu0 0
      %1839 = vmatpush2.bf16.msra.mxu0 0
      %1840 = vmatprep.subr.bf16.mxu0 0
      %1841 = vmatpush2.bf16.msra.mxu0 0
      %1842 = vmatprep.subr.bf16.mxu0 0
      %1843 = vmatpush2.bf16.msra.mxu0 0
      %1844 = vmatprep.subr.bf16.mxu0 0
      %1845 = vmatpush2.bf16.msra.mxu0 0
      %1846 = vmatprep.subr.bf16.mxu0 0
      %1847 = vmatpush2.bf16.msra.mxu0 0
      %1848 = vmatprep.subr.bf16.mxu0 0
      %1849 = vmatpush2.bf16.msra.mxu0 0
      %1850 = vmatprep.mubr.bf16.mxu0 0
      %1851 = vmatmul.mubr.bf16.gmra.mxu0 %v1816
      %v1852 = vpop.f32.mrf.mxu0
      %v1853 = vadd.f32 %v1796, %v1852
      %v1854 = vpop.f32.mrf.mxu0
      %v1855 = vpop.f32.mrf.mxu0
      %v1856 = vadd.f32 %v1796, %v1855
      %v1857 = vpop.f32.mrf.mxu0
      %1858 = vdwg.mxu0
      %v1859 = vadd.f32 %v704, %v1853
      %v1860 = vadd.f32 %v705, %v1856
      %v1861 = vld [vmem:[%s662] sm:$0x1]
      %v1862 = vld [vmem:[%s665] sm:$0x1]
      %v1863 = vsel %vm730, %v1859, 0.0
      %1864 = vadd.xlane.f32.xlu0 %v1863
      %v1865 = vpop.xlane.xlu0 %1864
      %v1866 = vsel %vm730, %v1860, 0.0
      %1867 = vadd.xlane.f32.xlu0 %v1866
      %v1868 = vpop.xlane.xlu0 %1867
      %v1869 = vrcp.pop 32.0
      %v1870 = vmul.f32 %v1865, %v1869
      %v1871 = vmul.f32 %v1868, %v1869
      %v1872 = vsub.f32 %v1859, %v1870
      %v1873 = vsub.f32 %v1860, %v1871
      %v1874 = vmul.f32 %v1872, %v1872
      %v1875 = vmul.f32 %v1873, %v1873
      %v1876 = vsel %vm730, %v1874, 0.0
      %1877 = vadd.xlane.f32.xlu0 %v1876
      %v1878 = vpop.xlane.xlu0 %1877
      %v1879 = vsel %vm730, %v1875, 0.0
      %1880 = vadd.xlane.f32.xlu0 %v1879
      %v1881 = vpop.xlane.xlu0 %1880
      %v1882 = vmul.f32 %v1878, %v1869
      %v1883 = vmul.f32 %v1881, %v1869
      %v1884 = vadd.f32 %v1882, 1e-05
      %v1885 = vadd.f32 %v1883, 1e-05
      %v1886 = vrsqrt.pop %v1884
      %v1887 = vrsqrt.pop %v1885
      %v1888 = vmul.f32 %v1872, %v1886
      %v1889 = vmul.f32 %v1873, %v1887
      %v1891 = vlaneseq
      %v1892 = vshrl.u32 %v1891, 7
      %v1893 = vsub.s32 0, %v1892
      %v1894 = vrot.slane %v1861, %v1893
      %v1896 = vmul.f32 %v1888, %v1894
      %v1897 = vmul.f32 %v1889, %v1894
      %v1899 = vlaneseq
      %v1900 = vshrl.u32 %v1899, 7
      %v1901 = vsub.s32 0, %v1900
      %v1902 = vrot.slane %v1862, %v1901
      %v1904 = vadd.f32 %v1896, %v1902
      %v1905 = vadd.f32 %v1897, %v1902
      %v1906 = vpack.c.bf16 %v1905, %v1904
      %v1907 = vld [vmem:[%s670] sm:$0xf]
      %v1908 = vld [vmem:[%s670 + $0x4] sm:$0xf]
      %v1909 = vld [vmem:[%s670 + $0x8] sm:$0xf]
      %v1910 = vld [vmem:[%s670 + $0xc] sm:$0xf]
      %v1911 = vld [vmem:[%s673] sm:$0x1]
      %v1913 = vlaneseq
      %v1914 = vshrl.u32 %v1913, 7
      %v1915 = vsub.s32 0, %v1914
      %v1916 = vrot.slane %v1911, %v1915
      %v1922 = vunpack.c.l.b16 %v1907
      %v1923 = vunpack.c.l.b16 %v1908
      %v1924 = vunpack.c.l.b16 %v1909
      %v1925 = vunpack.c.l.b16 %v1910
      %v1926 = vpack.c.b16 %v1923, %v1922
      %v1927 = vpack.c.b16 %v1925, %v1924
      %v1931 = vsel %vm730, %v1906, 0
      %1933 = vmatprep.subr.bf16.mxu0 0
      %1934 = vmatpush1.bf16.msra.mxu0 0
      %1935 = vmatprep.subr.bf16.mxu0 0
      %1936 = vmatpush1.bf16.msra.mxu0 0
      %1937 = vmatprep.subr.bf16.mxu0 0
      %1938 = vmatpush1.bf16.msra.mxu0 0
      %1939 = vmatprep.subr.bf16.mxu0 0
      %1940 = vmatpush1.bf16.msra.mxu0 0
      %1941 = vmatprep.subr.bf16.mxu0 0
      %1942 = vmatpush1.bf16.msra.mxu0 0
      %1943 = vmatprep.subr.bf16.mxu0 0
      %1944 = vmatpush1.bf16.msra.mxu0 0
      %1945 = vmatprep.subr.bf16.mxu0 0
      %1946 = vmatpush1.bf16.msra.mxu0 %v1927
      %1947 = vmatprep.subr.bf16.mxu0 0
      %1948 = vmatpush1.bf16.msra.mxu0 %v1926
      %1949 = vmatprep.subr.bf16.mxu0 0
      %1950 = vmatpush2.bf16.msra.mxu0 0
      %1951 = vmatprep.subr.bf16.mxu0 0
      %1952 = vmatpush2.bf16.msra.mxu0 0
      %1953 = vmatprep.subr.bf16.mxu0 0
      %1954 = vmatpush2.bf16.msra.mxu0 0
      %1955 = vmatprep.subr.bf16.mxu0 0
      %1956 = vmatpush2.bf16.msra.mxu0 0
      %1957 = vmatprep.subr.bf16.mxu0 0
      %1958 = vmatpush2.bf16.msra.mxu0 0
      %1959 = vmatprep.subr.bf16.mxu0 0
      %1960 = vmatpush2.bf16.msra.mxu0 0
      %1961 = vmatprep.subr.bf16.mxu0 0
      %1962 = vmatpush2.bf16.msra.mxu0 0
      %1963 = vmatprep.subr.bf16.mxu0 0
      %1964 = vmatpush2.bf16.msra.mxu0 0
      %1965 = vmatprep.mubr.bf16.mxu0 0
      %1966 = vmatmul.mubr.bf16.gmra.mxu0 %v1931
      %v1967 = vpop.f32.mrf.mxu0
      %v1968 = vadd.f32 %v1916, %v1967
      %v1969 = vpop.f32.mrf.mxu0
      %v1970 = vpop.f32.mrf.mxu0
      %v1971 = vadd.f32 %v1916, %v1970
      %v1972 = vpop.f32.mrf.mxu0
      %1973 = vdwg.mxu0
      %v1974 = vmax.f32 %v1968, 0.0
      %v1975 = vmax.f32 %v1971, 0.0
      %v1976 = vpack.c.bf16 %v1975, %v1974
      %v1977 = vld [vmem:[%s678] sm:$0xf]
      %v1978 = vld [vmem:[%s678 + $0x4] sm:$0xf]
      %v1979 = vld [vmem:[%s678 + $0x8] sm:$0xf]
      %v1980 = vld [vmem:[%s678 + $0xc] sm:$0xf]
      %v1981 = vld [vmem:[%s678 + $0x10] sm:$0xf]
      %v1982 = vld [vmem:[%s678 + $0x14] sm:$0xf]
      %v1983 = vld [vmem:[%s678 + $0x18] sm:$0xf]
      %v1984 = vld [vmem:[%s678 + $0x1c] sm:$0xf]
      %v1985 = vld [vmem:[%s681] sm:$0x1]
      %v1987 = vlaneseq
      %v1988 = vshrl.u32 %v1987, 7
      %v1989 = vsub.s32 0, %v1988
      %v1990 = vrot.slane %v1985, %v1989
      %v2000 = vunpack.c.l.b16 %v1977
      %v2001 = vunpack.c.l.b16 %v1978
      %v2002 = vunpack.c.l.b16 %v1979
      %v2003 = vunpack.c.l.b16 %v1980
      %v2004 = vunpack.c.l.b16 %v1981
      %v2005 = vunpack.c.l.b16 %v1982
      %v2006 = vunpack.c.l.b16 %v1983
      %v2007 = vunpack.c.l.b16 %v1984
      %v2008 = vpack.c.b16 %v2001, %v2000
      %v2009 = vpack.c.b16 %v2003, %v2002
      %v2010 = vpack.c.b16 %v2005, %v2004
      %v2011 = vpack.c.b16 %v2007, %v2006
      %vm2016 = vcmask 523264
      %v2018 = vsel %vm2016, %v1976, 0
      %2020 = vmatprep.subr.bf16.mxu0 0
      %2021 = vmatpush1.bf16.msra.mxu0 0
      %2022 = vmatprep.subr.bf16.mxu0 0
      %2023 = vmatpush1.bf16.msra.mxu0 0
      %2024 = vmatprep.subr.bf16.mxu0 0
      %2025 = vmatpush1.bf16.msra.mxu0 0
      %2026 = vmatprep.subr.bf16.mxu0 0
      %2027 = vmatpush1.bf16.msra.mxu0 0
      %2028 = vmatprep.subr.bf16.mxu0 0
      %2029 = vmatpush1.bf16.msra.mxu0 %v2011
      %2030 = vmatprep.subr.bf16.mxu0 0
      %2031 = vmatpush1.bf16.msra.mxu0 %v2010
      %2032 = vmatprep.subr.bf16.mxu0 0
      %2033 = vmatpush1.bf16.msra.mxu0 %v2009
      %2034 = vmatprep.subr.bf16.mxu0 0
      %2035 = vmatpush1.bf16.msra.mxu0 %v2008
      %2036 = vmatprep.subr.bf16.mxu0 0
      %2037 = vmatpush2.bf16.msra.mxu0 0
      %2038 = vmatprep.subr.bf16.mxu0 0
      %2039 = vmatpush2.bf16.msra.mxu0 0
      %2040 = vmatprep.subr.bf16.mxu0 0
      %2041 = vmatpush2.bf16.msra.mxu0 0
      %2042 = vmatprep.subr.bf16.mxu0 0
      %2043 = vmatpush2.bf16.msra.mxu0 0
      %2044 = vmatprep.subr.bf16.mxu0 0
      %2045 = vmatpush2.bf16.msra.mxu0 0
      %2046 = vmatprep.subr.bf16.mxu0 0
      %2047 = vmatpush2.bf16.msra.mxu0 0
      %2048 = vmatprep.subr.bf16.mxu0 0
      %2049 = vmatpush2.bf16.msra.mxu0 0
      %2050 = vmatprep.subr.bf16.mxu0 0
      %2051 = vmatpush2.bf16.msra.mxu0 0
      %2052 = vmatprep.mubr.bf16.mxu0 0
      %2053 = vmatmul.mubr.bf16.gmra.mxu0 %v2018
      %v2054 = vpop.f32.mrf.mxu0
      %v2055 = vadd.f32 %v1990, %v2054
      %v2056 = vpop.f32.mrf.mxu0
      %v2057 = vpop.f32.mrf.mxu0
      %v2058 = vadd.f32 %v1990, %v2057
      %v2059 = vpop.f32.mrf.mxu0
      %2060 = vdwg.mxu0
      %v2061 = vadd.f32 %v1904, %v2055
      %v2062 = vadd.f32 %v1905, %v2058
      %v2063 = vld [vmem:[%s684] sm:$0x1]
      %v2064 = vld [vmem:[%s687] sm:$0x1]
      %v2065 = vsel %vm730, %v2061, 0.0
      %2066 = vadd.xlane.f32.xlu0 %v2065
      %v2067 = vpop.xlane.xlu0 %2066
      %v2068 = vsel %vm730, %v2062, 0.0
      %2069 = vadd.xlane.f32.xlu0 %v2068
      %v2070 = vpop.xlane.xlu0 %2069
      %v2071 = vmul.f32 %v2067, %v1869
      %v2072 = vmul.f32 %v2070, %v1869
      %v2073 = vsub.f32 %v2061, %v2071
      %v2074 = vsub.f32 %v2062, %v2072
      %v2075 = vmul.f32 %v2073, %v2073
      %v2076 = vmul.f32 %v2074, %v2074
      %v2077 = vsel %vm730, %v2075, 0.0
      %2078 = vadd.xlane.f32.xlu0 %v2077
      %v2079 = vpop.xlane.xlu0 %2078
      %v2080 = vsel %vm730, %v2076, 0.0
      %2081 = vadd.xlane.f32.xlu0 %v2080
      %v2082 = vpop.xlane.xlu0 %2081
      %v2083 = vmul.f32 %v2079, %v1869
      %v2084 = vmul.f32 %v2082, %v1869
      %v2085 = vadd.f32 %v2083, 1e-05
      %v2086 = vadd.f32 %v2084, 1e-05
      %v2087 = vrsqrt.pop %v2085
      %v2088 = vrsqrt.pop %v2086
      %v2089 = vmul.f32 %v2073, %v2087
      %v2090 = vmul.f32 %v2074, %v2088
      %v2092 = vlaneseq
      %v2093 = vshrl.u32 %v2092, 7
      %v2094 = vsub.s32 0, %v2093
      %v2095 = vrot.slane %v2063, %v2094
      %v2097 = vmul.f32 %v2089, %v2095
      %v2098 = vmul.f32 %v2090, %v2095
      %v2100 = vlaneseq
      %v2101 = vshrl.u32 %v2100, 7
      %v2102 = vsub.s32 0, %v2101
      %v2103 = vrot.slane %v2064, %v2102
      %v2105 = vadd.f32 %v2097, %v2103
      %v2106 = vadd.f32 %v2098, %v2103
      %2107 = vst.msk [vmem:[%s692] sm:$0xff] %vm730, %v2105
      %2108 = vst.msk [vmem:[%s692 + $0x8] sm:$0xff] %vm730, %v2106
      %s2109 = smul.u32 2, %s29
      %p2110 = scmp.lt.s32.totalorder %s2109, 1
      %s2111 = scalar_select %p2110, %s2109, 1
      %s2112 = smul.addr %s2111, 8
      %s2113 = scalar_lea.vmem %s14, %s2112
      // Predicated region
      $region81: #{hawkes_transformer_forward.1} parent=75 // pred_check
        %p2114 = pneg %p419
      $region82: #{hawkes_transformer_forward.1} parent=75 // pred_check_branch
        %2116 = sbr.rel (%p2114) target = $region84
      $region83: #{hawkes_transformer_forward.1} parent=75 // pred_region
        %s2117 = smul.u32 2, %s29
      $region84: #{hawkes_transformer_forward.1} parent=75 // pred_fallthru
        _
      // Predicated region
      $region85: #{hawkes_transformer_forward.1} parent=75 // pred_check
        %p2118 = pneg %p419
      $region86: #{hawkes_transformer_forward.1} parent=75 // pred_check_branch
        %2120 = sbr.rel (%p2118) target = $region88
      $region87: #{hawkes_transformer_forward.1} parent=75 // pred_region
        %s2121 = smul.u32 2, %s29
        %p2122 = scmp.lt.s32.totalorder %s2121, 1
        %s2123 = scalar_select %p2122, %s2121, 1
        %s2124 = smul.addr %s2123, 8
        %s2125 = scalar_lea.vmem %s14, %s2124
      $region88: #{hawkes_transformer_forward.1} parent=75 // pred_fallthru
        _
    $region76: #{hawkes_transformer_forward.1} parent=5 // pred_fallthru
      _
    %p2126 = scmp.le.s32.totalorder 2, %s20
    // Predicated region
    $region89: #{hawkes_transformer_forward.1} parent=5 // pred_check
      %p2127 = pneg %p2126
    $region90: #{hawkes_transformer_forward.1} parent=5 // pred_check_branch
      %2129 = sbr.rel (%p2127) target = $region92
    $region91: #{hawkes_transformer_forward.1} parent=5 // pred_region
      %s2130 = ssub.s32 %s20, 2
    $region92: #{hawkes_transformer_forward.1} parent=5 // pred_fallthru
      _
  $region6: #{hawkes_transformer_forward.1} parent=0 // loop_footer
    %s24 = sadd.s32 1, %s20
  $region7: #{hawkes_transformer_forward.1} parent=0 // loop_footer_branch
    %19 = sbr.rel target = $region3
  $region8: #{hawkes_transformer_forward.1} parent=0 // loop_exit
    _

</llo_original>
